<compile_context>
chip_gen: v6e
topology: v6e:2x2x1
jax: 0.10.0
libtpu: 0.0.40
codegen_flags: <defaults>
</compile_context>

<pallas_src>
import math
import functools

import jax
import jax.numpy as jnp
from jax import lax
from jax.experimental import pallas as pl
from jax.experimental.pallas import tpu as pltpu


def _fast_recip(x):
    """EUP approximate reciprocal refined to ~f32 accuracy.  Only touches the
    tiny (tb, S, 1) softmax row-sum; safe because the max-subtracted row-sum
    is >= 1 (keep the max subtraction if refactoring)."""
    r = pl.reciprocal(x, approx=True)
    r = r * (2.0 - x * r)
    r = r * (2.0 - x * r)
    return r


def _pma_kernel(q_ref, qsc_ref, x_ref, wkt_ref, bk_ref, wvt_ref, bv_ref,
                wot_ref, bo_ref, o_ref, o_scr, *,
                num_heads, dim_V, num_seeds, tb, seq, dim_in, compute_dtype):
    cd = compute_dtype
    d_head = dim_V // num_heads

    # ---- K / V projections fused over the TB batch elements (f32 accum). ----
    xb = x_ref[...].reshape(tb * seq, dim_in)                    # already cd
    kc = (jnp.dot(xb, wkt_ref[...], preferred_element_type=jnp.float32)
          + bk_ref[...]).astype(cd)                              # (TB*N, dV)
    vc = (jnp.dot(xb, wvt_ref[...], preferred_element_type=jnp.float32)
          + bv_ref[...]).astype(cd)
    k3 = kc.reshape(tb, seq, dim_V)
    v3 = vc.reshape(tb, seq, dim_V)

    q = q_ref[...]                                               # (S, dV) f32
    # Pre-scaled Q (scale folded in on host) broadcast over the batch block
    # once, hoisted out of the head loop (broadcast_in_dim is not CSE'd).
    qb = jnp.broadcast_to(qsc_ref[...][None], (tb, num_seeds, dim_V))

    # ---- per-head attention, batched over tb via dot_general batch dims ----
    for h in range(num_heads):                                   # static, small
        cols = slice(h * d_head, (h + 1) * d_head)
        qh = qb[:, :, cols]                                      # (tb, S, d)
        kh = k3[:, :, cols]                                      # (tb, N, d)
        vh = v3[:, :, cols]                                      # (tb, N, d)
        # scores: contract last dims, batch over tb -> no K transpose
        s = lax.dot_general(qh, kh, (((2,), (2,)), ((0,), (0,))),
                            preferred_element_type=jnp.float32)  # (tb, S, N)
        s = s - jnp.max(s, axis=-1, keepdims=True)
        e = jnp.exp(s)
        a = e * _fast_recip(jnp.sum(e, axis=-1, keepdims=True))  # softmax
        av = lax.dot_general(a.astype(cd), vh, (((2,), (1,)), ((0,), (0,))),
                             preferred_element_type=jnp.float32)  # (tb, S, d)
        oh = q[:, cols][None, :, :] + av                         # residual, f32
        o_scr[:, cols] = oh.reshape(tb * num_seeds, d_head)      # head slice

    # ---- output projection + ReLU residual; one lane/sublane-dense store ----
    o_all = o_scr[...]                                           # (TB*S, dV) f32
    fc = jnp.dot(o_all.astype(cd), wot_ref[...],
                 preferred_element_type=jnp.float32) + bo_ref[...]
    o_ref[...] = (o_all + jnp.maximum(fc, 0.0)).astype(o_ref.dtype)


def _vmem_budget_bytes():
    try:
        cap = getattr(pltpu.get_tpu_info(), "vmem_capacity_bytes", None)
        if cap:
            return int(cap)
    except Exception:
        pass
    return 64 * 1024 * 1024          # conservative (v7x per-TensorCore)


def _per_step_bytes(tb, seq, num_seeds, dim_in, dim_V, cd):
    """Approximate VMEM footprint of one grid step."""
    bpe = jnp.dtype(cd).itemsize
    x_blk = tb * seq * dim_in * bpe                 # streamed input block
    weights = 3 * dim_in * dim_V * bpe + 3 * dim_V * 4
    q_bufs = num_seeds * dim_V * (4 + bpe)
    kv = 2 * tb * seq * dim_V * bpe                 # kc / vc temps
    scr = tb * num_seeds * dim_V * 4                # o_scr
    attn = 2 * tb * num_seeds * seq * 4             # score / prob temps
    out_blk = tb * num_seeds * dim_V * 4
    return 2 * x_blk + 2 * weights + 2 * q_bufs + kv + scr + attn + 2 * out_blk


def _pick_tb(batch, seq, num_seeds, dim_in, dim_V, cd, max_rows=1024):
    """Largest divisor of `batch` that fits the VMEM budget, keeps the output
    block 8-sublane aligned, and (preferably) leaves an even number of >= 2
    grid steps so the 'parallel' batch axis splits across v7x's 2 TCs."""
    budget = int(0.6 * _vmem_budget_bytes())

    def ok(d):
        if batch % d:
            return False
        if d * seq > max_rows:
            return False
        if (d * num_seeds) % 8 != 0 and d != batch:
            return False
        return _per_step_bytes(d, seq, num_seeds, dim_in, dim_V, cd) <= budget

    divs = [d for d in range(1, batch + 1) if ok(d)]
    if not divs:
        divs = [d for d in range(1, batch + 1)
                if batch % d == 0 and ((d * num_seeds) % 8 == 0 or d == batch)]
    if not divs:
        divs = [batch]
    even = [d for d in divs if (batch // d) >= 2 and (batch // d) % 2 == 0]
    if even:
        return max(even)
    multi = [d for d in divs if (batch // d) >= 2]
    return max(multi) if multi else max(divs)


def pma_forward(x, params, *, num_heads, compute_dtype=jnp.bfloat16, tb=None):
    """x: (B, N, dim) f32.  params: S plus wq/bq, wk/bk, wv/bv, wo/bo in
    PyTorch Linear layout ((out, in) weights)."""
    B, N, dim_in = x.shape
    dim_V = params["wq"].shape[0]
    num_seeds = params["S"].shape[1]
    assert dim_V % num_heads == 0

    cd = compute_dtype
    if tb is None:
        tb = _pick_tb(B, N, num_seeds, dim_in, dim_V, cd)
    assert B % tb == 0, "batch must be divisible by the per-step batch tile"

    scale = 1.0 / math.sqrt(dim_V)   # MAB scales by sqrt(dim_V), not head dim

    # ---- host-side prep ----------------------------------------------------
    # Hoisted Q projection: the seed vectors are shared by every batch element,
    # so compute Q once with plain XLA instead of per grid step on a <8-row MXU.
    s2d = params["S"].reshape(num_seeds, dim_in).astype(jnp.float32)
    q = s2d @ params["wq"].T.astype(jnp.float32) + params["bq"].astype(jnp.float32)
    q_sc = (q * scale).astype(cd)                     # scaled copy for scores

    x_cd = x.astype(cd)                               # pre-cast streamed input
    wkt = params["wk"].T.astype(cd)                   # (in, out) layout
    wvt = params["wv"].T.astype(cd)
    wot = params["wo"].T.astype(cd)
    bk = params["bk"].reshape(1, dim_V).astype(jnp.float32)
    bv = params["bv"].reshape(1, dim_V).astype(jnp.float32)
    bo = params["bo"].reshape(1, dim_V).astype(jnp.float32)

    full2d = lambda a: pl.BlockSpec(a.shape, lambda b: (0, 0))

    kernel = functools.partial(
        _pma_kernel, num_heads=num_heads, dim_V=dim_V, num_seeds=num_seeds,
        tb=tb, seq=N, dim_in=dim_in, compute_dtype=cd)

    need = 2 * _per_step_bytes(tb, N, num_seeds, dim_in, dim_V, cd)
    vmem_limit = int(max(32 * 1024 * 1024,
                         min(need, int(0.9 * _vmem_budget_bytes()))))

    out2d = pl.pallas_call(
        kernel,
        out_shape=jax.ShapeDtypeStruct((B * num_seeds, dim_V), jnp.float32),
        grid_spec=pltpu.PrefetchScalarGridSpec(
            num_scalar_prefetch=0,
            grid=(B // tb,),
            in_specs=[
                full2d(q), full2d(q_sc),
                pl.BlockSpec((tb, N, dim_in), lambda b: (b, 0, 0)),
                full2d(wkt), full2d(bk),
                full2d(wvt), full2d(bv),
                full2d(wot), full2d(bo),
            ],
            out_specs=pl.BlockSpec((tb * num_seeds, dim_V), lambda b: (b, 0)),
            scratch_shapes=[pltpu.VMEM((tb * num_seeds, dim_V), jnp.float32)],
        ),
        compiler_params=pltpu.CompilerParams(
            dimension_semantics=("parallel",),
            vmem_limit_bytes=vmem_limit),
    )(q, q_sc, x_cd, wkt, bk, wvt, bv, wot, bo)
    return out2d.reshape(B, num_seeds, dim_V)


def _init_params(key, dim, num_heads, num_seeds):
    ks = jax.random.split(key, 9)

    def lin(kw, kb, fan_in, fan_out):
        bound = 1.0 / math.sqrt(fan_in)
        w = jax.random.uniform(kw, (fan_out, fan_in), jnp.float32, -bound, bound)
        b = jax.random.uniform(kb, (fan_out,), jnp.float32, -bound, bound)
        return w, b

    wq, bq = lin(ks[0], ks[1], dim, dim)
    wk, bk = lin(ks[2], ks[3], dim, dim)
    wv, bv = lin(ks[4], ks[5], dim, dim)
    wo, bo = lin(ks[6], ks[7], dim, dim)
    # xavier_uniform-style init for the seed tensor S (1, num_seeds, dim)
    xav = math.sqrt(6.0 / (dim + num_seeds))
    S = jax.random.uniform(ks[8], (1, num_seeds, dim), jnp.float32, -xav, xav)
    return dict(S=S, wq=wq, bq=bq, wk=wk, bk=bk, wv=wv, bv=bv, wo=wo, bo=bo)


def _reference(x, p, num_heads):
    """Pure-JAX mirror of PMA.forward (MAB with ln=False, Q from seeds)."""
    B = x.shape[0]
    dim_V = p["wq"].shape[0]
    S = jnp.broadcast_to(p["S"], (B,) + p["S"].shape[1:])
    Q = S @ p["wq"].T + p["bq"]
    K = x @ p["wk"].T + p["bk"]
    V = x @ p["wv"].T + p["bv"]
    split = lambda t: jnp.concatenate(jnp.split(t, num_heads, axis=2), axis=0)
    Q_, K_, V_ = split(Q), split(K), split(V)
    A = jax.nn.softmax(
        jnp.einsum("bsd,bnd->bsn", Q_, K_) / math.sqrt(dim_V), axis=2)
    O = Q_ + jnp.einsum("bsn,bnd->bsd", A, V_)
    O = jnp.concatenate(jnp.split(O, num_heads, axis=0), axis=2)
    return O + jax.nn.relu(O @ p["wo"].T + p["bo"])


if __name__ == "__main__":
    B, N = 4, 16                      # batch of sets, elements per set
    dim, num_heads, num_seeds = 32, 4, 4

    key = jax.random.PRNGKey(0)
    kx, kp = jax.random.split(key)
    x = jax.random.normal(kx, (B, N, dim), jnp.float32)
    params = _init_params(kp, dim, num_heads, num_seeds)

    ref = _reference(x, params, num_heads)

    # f32 MXU operands: tight correctness check.
    out_f32 = jax.block_until_ready(
        pma_forward(x, params, num_heads=num_heads, compute_dtype=jnp.float32))
    assert out_f32.shape == (B, num_seeds, dim)
    assert jnp.allclose(out_f32, ref, atol=1e-4, rtol=1e-4), "f32 mismatch vs reference"

    # bf16 MXU operands with f32 accumulation (MXU-native fast path).
    out_bf16 = jax.block_until_ready(
        pma_forward(x, params, num_heads=num_heads, compute_dtype=jnp.bfloat16))
    assert out_bf16.shape == (B, num_seeds, dim)
    assert jnp.allclose(out_bf16, ref, atol=5e-2, rtol=5e-2), "bf16 mismatch vs reference"

    print("KERNEL_OK")
</pallas_src>

<mosaic_0001>
module attributes {stable_mosaic.version = 11 : i64} {
  func.func @_pma_kernel(%arg0: i32, %arg1: memref<4x32xf32, #tpu.memory_space<vmem>>, %arg2: memref<4x32xf32, #tpu.memory_space<vmem>>, %arg3: memref<2x16x32xf32, #tpu.memory_space<vmem>>, %arg4: memref<32x32xf32, #tpu.memory_space<vmem>>, %arg5: memref<1x32xf32, #tpu.memory_space<vmem>>, %arg6: memref<32x32xf32, #tpu.memory_space<vmem>>, %arg7: memref<1x32xf32, #tpu.memory_space<vmem>>, %arg8: memref<32x32xf32, #tpu.memory_space<vmem>>, %arg9: memref<1x32xf32, #tpu.memory_space<vmem>>, %arg10: memref<8x32xf32, #tpu.memory_space<vmem>>, %arg11: memref<8x32xf32, #tpu.memory_space<vmem>>) attributes {dimension_semantics = [#tpu.dimension_semantics<parallel>], iteration_bounds = array<i64: 2>, scalar_prefetch = 0 : i64, scratch_operands = 1 : i64, tpu.core_type = #tpu.core_type<tc>, window_params = [{pipeline_mode = #tpu.pipeline_mode<synchronous>, transform_indices = @transform_0, window_bounds = array<i64: 4, 32>}, {pipeline_mode = #tpu.pipeline_mode<synchronous>, transform_indices = @transform_1, window_bounds = array<i64: 4, 32>}, {transform_indices = @transform_2, window_bounds = array<i64: 2, 16, 32>}, {pipeline_mode = #tpu.pipeline_mode<synchronous>, transform_indices = @transform_3, window_bounds = array<i64: 32, 32>}, {pipeline_mode = #tpu.pipeline_mode<synchronous>, transform_indices = @transform_4, window_bounds = array<i64: 1, 32>}, {pipeline_mode = #tpu.pipeline_mode<synchronous>, transform_indices = @transform_5, window_bounds = array<i64: 32, 32>}, {pipeline_mode = #tpu.pipeline_mode<synchronous>, transform_indices = @transform_6, window_bounds = array<i64: 1, 32>}, {pipeline_mode = #tpu.pipeline_mode<synchronous>, transform_indices = @transform_7, window_bounds = array<i64: 32, 32>}, {pipeline_mode = #tpu.pipeline_mode<synchronous>, transform_indices = @transform_8, window_bounds = array<i64: 1, 32>}, {transform_indices = @transform_9, window_bounds = array<i64: 8, 32>}]} {
    %c0 = arith.constant 0 : index
    %c0_0 = arith.constant 0 : index
    %c0_1 = arith.constant 0 : index
    %0 = vector.load %arg3[%c0, %c0_0, %c0_1] : memref<2x16x32xf32, #tpu.memory_space<vmem>>, vector<2x16x32xf32>
    %1 = vector.shape_cast %0 : vector<2x16x32xf32> to vector<32x32xf32>
    %c0_2 = arith.constant 0 : index
    %c0_3 = arith.constant 0 : index
    %2 = vector.load %arg4[%c0_2, %c0_3] : memref<32x32xf32, #tpu.memory_space<vmem>>, vector<32x32xf32>
    %cst = arith.constant dense<0.000000e+00> : vector<32x32xf32>
    %3 = tpu.matmul %1, %2, %cst {dimension_numbers = #tpu.dot_dimension_numbers<[1], [0], [0], [1], [0, 0, 1, 1], [], []>} : vector<32x32xf32>, vector<32x32xf32>, vector<32x32xf32> -> vector<32x32xf32>
    %c0_4 = arith.constant 0 : index
    %c0_5 = arith.constant 0 : index
    %4 = vector.load %arg5[%c0_4, %c0_5] : memref<1x32xf32, #tpu.memory_space<vmem>>, vector<1x32xf32>
    %5 = vector.broadcast %4 : vector<1x32xf32> to vector<32x32xf32>
    %6 = arith.addf %3, %5 : vector<32x32xf32>
    %c0_6 = arith.constant 0 : index
    %c0_7 = arith.constant 0 : index
    %7 = vector.load %arg6[%c0_6, %c0_7] : memref<32x32xf32, #tpu.memory_space<vmem>>, vector<32x32xf32>
    %cst_8 = arith.constant dense<0.000000e+00> : vector<32x32xf32>
    %8 = tpu.matmul %1, %7, %cst_8 {dimension_numbers = #tpu.dot_dimension_numbers<[1], [0], [0], [1], [0, 0, 1, 1], [], []>} : vector<32x32xf32>, vector<32x32xf32>, vector<32x32xf32> -> vector<32x32xf32>
    %c0_9 = arith.constant 0 : index
    %c0_10 = arith.constant 0 : index
    %9 = vector.load %arg7[%c0_9, %c0_10] : memref<1x32xf32, #tpu.memory_space<vmem>>, vector<1x32xf32>
    %10 = vector.broadcast %9 : vector<1x32xf32> to vector<32x32xf32>
    %11 = arith.addf %8, %10 : vector<32x32xf32>
    %12 = vector.shape_cast %6 : vector<32x32xf32> to vector<2x16x32xf32>
    %13 = vector.shape_cast %11 : vector<32x32xf32> to vector<2x16x32xf32>
    %c0_11 = arith.constant 0 : index
    %c0_12 = arith.constant 0 : index
    %14 = vector.load %arg1[%c0_11, %c0_12] : memref<4x32xf32, #tpu.memory_space<vmem>>, vector<4x32xf32>
    %c0_13 = arith.constant 0 : index
    %c0_14 = arith.constant 0 : index
    %15 = vector.load %arg2[%c0_13, %c0_14] : memref<4x32xf32, #tpu.memory_space<vmem>>, vector<4x32xf32>
    %16 = vector.shape_cast %15 : vector<4x32xf32> to vector<1x4x32xf32>
    %17 = vector.shape_cast %16 : vector<1x4x32xf32> to vector<1x4x32xf32>
    %18 = vector.broadcast %17 : vector<1x4x32xf32> to vector<2x4x32xf32>
    %19 = vector.extract_strided_slice %18 {offsets = [0, 0, 0], sizes = [2, 4, 8], strides = [1, 1, 1]} : vector<2x4x32xf32> to vector<2x4x8xf32>
    %20 = vector.extract_strided_slice %12 {offsets = [0, 0, 0], sizes = [2, 16, 8], strides = [1, 1, 1]} : vector<2x16x32xf32> to vector<2x16x8xf32>
    %21 = vector.extract_strided_slice %13 {offsets = [0, 0, 0], sizes = [2, 16, 8], strides = [1, 1, 1]} : vector<2x16x32xf32> to vector<2x16x8xf32>
    %cst_15 = arith.constant dense<0.000000e+00> : vector<2x4x16xf32>
    %22 = tpu.matmul %19, %20, %cst_15 {dimension_numbers = #tpu.dot_dimension_numbers<[2], [2], [1], [1], [0, 0, 0, 1, 1, 1], [0], [0]>} : vector<2x4x8xf32>, vector<2x16x8xf32>, vector<2x4x16xf32> -> vector<2x4x16xf32>
    %cst_16 = arith.constant dense<0xFF800000> : vector<2x4xf32>
    %23 = vector.multi_reduction <maximumf>, %22, %cst_16 [2] : vector<2x4x16xf32> to vector<2x4xf32>
    %24 = vector.shape_cast %23 : vector<2x4xf32> to vector<2x4x1xf32>
    %25 = vector.broadcast %24 : vector<2x4x1xf32> to vector<2x4x16xf32>
    %26 = arith.subf %22, %25 : vector<2x4x16xf32>
    %27 = math.exp %26 : vector<2x4x16xf32>
    %cst_17 = arith.constant dense<0.000000e+00> : vector<2x4xf32>
    %28 = vector.multi_reduction <add>, %27, %cst_17 [2] : vector<2x4x16xf32> to vector<2x4xf32>
    %29 = vector.shape_cast %28 : vector<2x4xf32> to vector<2x4x1xf32>
    %30 = tpu.reciprocal %29 {approx = true} : vector<2x4x1xf32> -> vector<2x4x1xf32>
    %31 = arith.mulf %29, %30 : vector<2x4x1xf32>
    %cst_18 = arith.constant 2.000000e+00 : f32
    %32 = vector.broadcast %cst_18 : f32 to vector<2x4x1xf32>
    %33 = arith.subf %32, %31 : vector<2x4x1xf32>
    %34 = arith.mulf %30, %33 : vector<2x4x1xf32>
    %35 = arith.mulf %29, %34 : vector<2x4x1xf32>
    %cst_19 = arith.constant 2.000000e+00 : f32
    %36 = vector.broadcast %cst_19 : f32 to vector<2x4x1xf32>
    %37 = arith.subf %36, %35 : vector<2x4x1xf32>
    %38 = arith.mulf %34, %37 : vector<2x4x1xf32>
    %39 = vector.broadcast %38 : vector<2x4x1xf32> to vector<2x4x16xf32>
    %40 = arith.mulf %27, %39 : vector<2x4x16xf32>
    %cst_20 = arith.constant dense<0.000000e+00> : vector<2x4x8xf32>
    %41 = tpu.matmul %40, %21, %cst_20 {dimension_numbers = #tpu.dot_dimension_numbers<[2], [1], [1], [2], [0, 0, 0, 1, 1, 2], [0], [0]>} : vector<2x4x16xf32>, vector<2x16x8xf32>, vector<2x4x8xf32> -> vector<2x4x8xf32>
    %42 = vector.extract_strided_slice %14 {offsets = [0, 0], sizes = [4, 8], strides = [1, 1]} : vector<4x32xf32> to vector<4x8xf32>
    %43 = vector.shape_cast %42 : vector<4x8xf32> to vector<1x4x8xf32>
    %44 = vector.broadcast %43 : vector<1x4x8xf32> to vector<2x4x8xf32>
    %45 = arith.addf %44, %41 : vector<2x4x8xf32>
    %46 = vector.shape_cast %45 : vector<2x4x8xf32> to vector<8x8xf32>
    %c0_21 = arith.constant 0 : index
    %c0_22 = arith.constant 0 : index
    %47 = vector.load %arg11[%c0_21, %c0_22] : memref<8x32xf32, #tpu.memory_space<vmem>>, vector<8x8xf32>
    tpu.vector_store %arg11[%c0_21, %c0_22], %46 {strides = array<i32>} : memref<8x32xf32, #tpu.memory_space<vmem>>, vector<8x8xf32>,
    %48 = vector.extract_strided_slice %18 {offsets = [0, 0, 8], sizes = [2, 4, 8], strides = [1, 1, 1]} : vector<2x4x32xf32> to vector<2x4x8xf32>
    %49 = vector.extract_strided_slice %12 {offsets = [0, 0, 8], sizes = [2, 16, 8], strides = [1, 1, 1]} : vector<2x16x32xf32> to vector<2x16x8xf32>
    %50 = vector.extract_strided_slice %13 {offsets = [0, 0, 8], sizes = [2, 16, 8], strides = [1, 1, 1]} : vector<2x16x32xf32> to vector<2x16x8xf32>
    %cst_23 = arith.constant dense<0.000000e+00> : vector<2x4x16xf32>
    %51 = tpu.matmul %48, %49, %cst_23 {dimension_numbers = #tpu.dot_dimension_numbers<[2], [2], [1], [1], [0, 0, 0, 1, 1, 1], [0], [0]>} : vector<2x4x8xf32>, vector<2x16x8xf32>, vector<2x4x16xf32> -> vector<2x4x16xf32>
    %cst_24 = arith.constant dense<0xFF800000> : vector<2x4xf32>
    %52 = vector.multi_reduction <maximumf>, %51, %cst_24 [2] : vector<2x4x16xf32> to vector<2x4xf32>
    %53 = vector.shape_cast %52 : vector<2x4xf32> to vector<2x4x1xf32>
    %54 = vector.broadcast %53 : vector<2x4x1xf32> to vector<2x4x16xf32>
    %55 = arith.subf %51, %54 : vector<2x4x16xf32>
    %56 = math.exp %55 : vector<2x4x16xf32>
    %cst_25 = arith.constant dense<0.000000e+00> : vector<2x4xf32>
    %57 = vector.multi_reduction <add>, %56, %cst_25 [2] : vector<2x4x16xf32> to vector<2x4xf32>
    %58 = vector.shape_cast %57 : vector<2x4xf32> to vector<2x4x1xf32>
    %59 = tpu.reciprocal %58 {approx = true} : vector<2x4x1xf32> -> vector<2x4x1xf32>
    %60 = arith.mulf %58, %59 : vector<2x4x1xf32>
    %cst_26 = arith.constant 2.000000e+00 : f32
    %61 = vector.broadcast %cst_26 : f32 to vector<2x4x1xf32>
    %62 = arith.subf %61, %60 : vector<2x4x1xf32>
    %63 = arith.mulf %59, %62 : vector<2x4x1xf32>
    %64 = arith.mulf %58, %63 : vector<2x4x1xf32>
    %cst_27 = arith.constant 2.000000e+00 : f32
    %65 = vector.broadcast %cst_27 : f32 to vector<2x4x1xf32>
    %66 = arith.subf %65, %64 : vector<2x4x1xf32>
    %67 = arith.mulf %63, %66 : vector<2x4x1xf32>
    %68 = vector.broadcast %67 : vector<2x4x1xf32> to vector<2x4x16xf32>
    %69 = arith.mulf %56, %68 : vector<2x4x16xf32>
    %cst_28 = arith.constant dense<0.000000e+00> : vector<2x4x8xf32>
    %70 = tpu.matmul %69, %50, %cst_28 {dimension_numbers = #tpu.dot_dimension_numbers<[2], [1], [1], [2], [0, 0, 0, 1, 1, 2], [0], [0]>} : vector<2x4x16xf32>, vector<2x16x8xf32>, vector<2x4x8xf32> -> vector<2x4x8xf32>
    %71 = vector.extract_strided_slice %14 {offsets = [0, 8], sizes = [4, 8], strides = [1, 1]} : vector<4x32xf32> to vector<4x8xf32>
    %72 = vector.shape_cast %71 : vector<4x8xf32> to vector<1x4x8xf32>
    %73 = vector.broadcast %72 : vector<1x4x8xf32> to vector<2x4x8xf32>
    %74 = arith.addf %73, %70 : vector<2x4x8xf32>
    %75 = vector.shape_cast %74 : vector<2x4x8xf32> to vector<8x8xf32>
    %c0_29 = arith.constant 0 : index
    %c8 = arith.constant 8 : index
    %76 = vector.load %arg11[%c0_29, %c8] : memref<8x32xf32, #tpu.memory_space<vmem>>, vector<8x8xf32>
    tpu.vector_store %arg11[%c0_29, %c8], %75 {strides = array<i32>} : memref<8x32xf32, #tpu.memory_space<vmem>>, vector<8x8xf32>,
    %77 = vector.extract_strided_slice %18 {offsets = [0, 0, 16], sizes = [2, 4, 8], strides = [1, 1, 1]} : vector<2x4x32xf32> to vector<2x4x8xf32>
    %78 = vector.extract_strided_slice %12 {offsets = [0, 0, 16], sizes = [2, 16, 8], strides = [1, 1, 1]} : vector<2x16x32xf32> to vector<2x16x8xf32>
    %79 = vector.extract_strided_slice %13 {offsets = [0, 0, 16], sizes = [2, 16, 8], strides = [1, 1, 1]} : vector<2x16x32xf32> to vector<2x16x8xf32>
    %cst_30 = arith.constant dense<0.000000e+00> : vector<2x4x16xf32>
    %80 = tpu.matmul %77, %78, %cst_30 {dimension_numbers = #tpu.dot_dimension_numbers<[2], [2], [1], [1], [0, 0, 0, 1, 1, 1], [0], [0]>} : vector<2x4x8xf32>, vector<2x16x8xf32>, vector<2x4x16xf32> -> vector<2x4x16xf32>
    %cst_31 = arith.constant dense<0xFF800000> : vector<2x4xf32>
    %81 = vector.multi_reduction <maximumf>, %80, %cst_31 [2] : vector<2x4x16xf32> to vector<2x4xf32>
    %82 = vector.shape_cast %81 : vector<2x4xf32> to vector<2x4x1xf32>
    %83 = vector.broadcast %82 : vector<2x4x1xf32> to vector<2x4x16xf32>
    %84 = arith.subf %80, %83 : vector<2x4x16xf32>
    %85 = math.exp %84 : vector<2x4x16xf32>
    %cst_32 = arith.constant dense<0.000000e+00> : vector<2x4xf32>
    %86 = vector.multi_reduction <add>, %85, %cst_32 [2] : vector<2x4x16xf32> to vector<2x4xf32>
    %87 = vector.shape_cast %86 : vector<2x4xf32> to vector<2x4x1xf32>
    %88 = tpu.reciprocal %87 {approx = true} : vector<2x4x1xf32> -> vector<2x4x1xf32>
    %89 = arith.mulf %87, %88 : vector<2x4x1xf32>
    %cst_33 = arith.constant 2.000000e+00 : f32
    %90 = vector.broadcast %cst_33 : f32 to vector<2x4x1xf32>
    %91 = arith.subf %90, %89 : vector<2x4x1xf32>
    %92 = arith.mulf %88, %91 : vector<2x4x1xf32>
    %93 = arith.mulf %87, %92 : vector<2x4x1xf32>
    %cst_34 = arith.constant 2.000000e+00 : f32
    %94 = vector.broadcast %cst_34 : f32 to vector<2x4x1xf32>
    %95 = arith.subf %94, %93 : vector<2x4x1xf32>
    %96 = arith.mulf %92, %95 : vector<2x4x1xf32>
    %97 = vector.broadcast %96 : vector<2x4x1xf32> to vector<2x4x16xf32>
    %98 = arith.mulf %85, %97 : vector<2x4x16xf32>
    %cst_35 = arith.constant dense<0.000000e+00> : vector<2x4x8xf32>
    %99 = tpu.matmul %98, %79, %cst_35 {dimension_numbers = #tpu.dot_dimension_numbers<[2], [1], [1], [2], [0, 0, 0, 1, 1, 2], [0], [0]>} : vector<2x4x16xf32>, vector<2x16x8xf32>, vector<2x4x8xf32> -> vector<2x4x8xf32>
    %100 = vector.extract_strided_slice %14 {offsets = [0, 16], sizes = [4, 8], strides = [1, 1]} : vector<4x32xf32> to vector<4x8xf32>
    %101 = vector.shape_cast %100 : vector<4x8xf32> to vector<1x4x8xf32>
    %102 = vector.broadcast %101 : vector<1x4x8xf32> to vector<2x4x8xf32>
    %103 = arith.addf %102, %99 : vector<2x4x8xf32>
    %104 = vector.shape_cast %103 : vector<2x4x8xf32> to vector<8x8xf32>
    %c0_36 = arith.constant 0 : index
    %c16 = arith.constant 16 : index
    %105 = vector.load %arg11[%c0_36, %c16] : memref<8x32xf32, #tpu.memory_space<vmem>>, vector<8x8xf32>
    tpu.vector_store %arg11[%c0_36, %c16], %104 {strides = array<i32>} : memref<8x32xf32, #tpu.memory_space<vmem>>, vector<8x8xf32>,
    %106 = vector.extract_strided_slice %18 {offsets = [0, 0, 24], sizes = [2, 4, 8], strides = [1, 1, 1]} : vector<2x4x32xf32> to vector<2x4x8xf32>
    %107 = vector.extract_strided_slice %12 {offsets = [0, 0, 24], sizes = [2, 16, 8], strides = [1, 1, 1]} : vector<2x16x32xf32> to vector<2x16x8xf32>
    %108 = vector.extract_strided_slice %13 {offsets = [0, 0, 24], sizes = [2, 16, 8], strides = [1, 1, 1]} : vector<2x16x32xf32> to vector<2x16x8xf32>
    %cst_37 = arith.constant dense<0.000000e+00> : vector<2x4x16xf32>
    %109 = tpu.matmul %106, %107, %cst_37 {dimension_numbers = #tpu.dot_dimension_numbers<[2], [2], [1], [1], [0, 0, 0, 1, 1, 1], [0], [0]>} : vector<2x4x8xf32>, vector<2x16x8xf32>, vector<2x4x16xf32> -> vector<2x4x16xf32>
    %cst_38 = arith.constant dense<0xFF800000> : vector<2x4xf32>
    %110 = vector.multi_reduction <maximumf>, %109, %cst_38 [2] : vector<2x4x16xf32> to vector<2x4xf32>
    %111 = vector.shape_cast %110 : vector<2x4xf32> to vector<2x4x1xf32>
    %112 = vector.broadcast %111 : vector<2x4x1xf32> to vector<2x4x16xf32>
    %113 = arith.subf %109, %112 : vector<2x4x16xf32>
    %114 = math.exp %113 : vector<2x4x16xf32>
    %cst_39 = arith.constant dense<0.000000e+00> : vector<2x4xf32>
    %115 = vector.multi_reduction <add>, %114, %cst_39 [2] : vector<2x4x16xf32> to vector<2x4xf32>
    %116 = vector.shape_cast %115 : vector<2x4xf32> to vector<2x4x1xf32>
    %117 = tpu.reciprocal %116 {approx = true} : vector<2x4x1xf32> -> vector<2x4x1xf32>
    %118 = arith.mulf %116, %117 : vector<2x4x1xf32>
    %cst_40 = arith.constant 2.000000e+00 : f32
    %119 = vector.broadcast %cst_40 : f32 to vector<2x4x1xf32>
    %120 = arith.subf %119, %118 : vector<2x4x1xf32>
    %121 = arith.mulf %117, %120 : vector<2x4x1xf32>
    %122 = arith.mulf %116, %121 : vector<2x4x1xf32>
    %cst_41 = arith.constant 2.000000e+00 : f32
    %123 = vector.broadcast %cst_41 : f32 to vector<2x4x1xf32>
    %124 = arith.subf %123, %122 : vector<2x4x1xf32>
    %125 = arith.mulf %121, %124 : vector<2x4x1xf32>
    %126 = vector.broadcast %125 : vector<2x4x1xf32> to vector<2x4x16xf32>
    %127 = arith.mulf %114, %126 : vector<2x4x16xf32>
    %cst_42 = arith.constant dense<0.000000e+00> : vector<2x4x8xf32>
    %128 = tpu.matmul %127, %108, %cst_42 {dimension_numbers = #tpu.dot_dimension_numbers<[2], [1], [1], [2], [0, 0, 0, 1, 1, 2], [0], [0]>} : vector<2x4x16xf32>, vector<2x16x8xf32>, vector<2x4x8xf32> -> vector<2x4x8xf32>
    %129 = vector.extract_strided_slice %14 {offsets = [0, 24], sizes = [4, 8], strides = [1, 1]} : vector<4x32xf32> to vector<4x8xf32>
    %130 = vector.shape_cast %129 : vector<4x8xf32> to vector<1x4x8xf32>
    %131 = vector.broadcast %130 : vector<1x4x8xf32> to vector<2x4x8xf32>
    %132 = arith.addf %131, %128 : vector<2x4x8xf32>
    %133 = vector.shape_cast %132 : vector<2x4x8xf32> to vector<8x8xf32>
    %c0_43 = arith.constant 0 : index
    %c24 = arith.constant 24 : index
    %134 = vector.load %arg11[%c0_43, %c24] : memref<8x32xf32, #tpu.memory_space<vmem>>, vector<8x8xf32>
    tpu.vector_store %arg11[%c0_43, %c24], %133 {strides = array<i32>} : memref<8x32xf32, #tpu.memory_space<vmem>>, vector<8x8xf32>,
    %c0_44 = arith.constant 0 : index
    %c0_45 = arith.constant 0 : index
    %135 = vector.load %arg11[%c0_44, %c0_45] : memref<8x32xf32, #tpu.memory_space<vmem>>, vector<8x32xf32>
    %c0_46 = arith.constant 0 : index
    %c0_47 = arith.constant 0 : index
    %136 = vector.load %arg8[%c0_46, %c0_47] : memref<32x32xf32, #tpu.memory_space<vmem>>, vector<32x32xf32>
    %cst_48 = arith.constant dense<0.000000e+00> : vector<8x32xf32>
    %137 = tpu.matmul %135, %136, %cst_48 {dimension_numbers = #tpu.dot_dimension_numbers<[1], [0], [0], [1], [0, 0, 1, 1], [], []>} : vector<8x32xf32>, vector<32x32xf32>, vector<8x32xf32> -> vector<8x32xf32>
    %c0_49 = arith.constant 0 : index
    %c0_50 = arith.constant 0 : index
    %138 = vector.load %arg9[%c0_49, %c0_50] : memref<1x32xf32, #tpu.memory_space<vmem>>, vector<1x32xf32>
    %139 = vector.broadcast %138 : vector<1x32xf32> to vector<8x32xf32>
    %140 = arith.addf %137, %139 : vector<8x32xf32>
    %cst_51 = arith.constant 0.000000e+00 : f32
    %141 = vector.broadcast %cst_51 : f32 to vector<8x32xf32>
    %142 = arith.maximumf %140, %141 : vector<8x32xf32>
    %143 = arith.addf %135, %142 : vector<8x32xf32>
    %c0_52 = arith.constant 0 : index
    %c0_53 = arith.constant 0 : index
    %144 = vector.load %arg10[%c0_52, %c0_53] : memref<8x32xf32, #tpu.memory_space<vmem>>, vector<8x32xf32>
    tpu.vector_store %arg10[%c0_52, %c0_53], %143 {strides = array<i32>} : memref<8x32xf32, #tpu.memory_space<vmem>>, vector<8x32xf32>,
    return
  }
  func.func @transform_0(%arg0: i32) -> (i32, i32) {
    %c0_i32 = arith.constant 0 : i32
    %c0_i32_0 = arith.constant 0 : i32
    %c0_i32_1 = arith.constant 0 : i32
    return %c0_i32, %c0_i32_0 : i32, i32
  }
  func.func @transform_1(%arg0: i32) -> (i32, i32) {
    %c0_i32 = arith.constant 0 : i32
    %c0_i32_0 = arith.constant 0 : i32
    %c0_i32_1 = arith.constant 0 : i32
    return %c0_i32, %c0_i32_0 : i32, i32
  }
  func.func @transform_2(%arg0: i32) -> (i32, i32, i32) {
    %c0_i32 = arith.constant 0 : i32
    %c0_i32_0 = arith.constant 0 : i32
    %c0_i32_1 = arith.constant 0 : i32
    return %arg0, %c0_i32, %c0_i32_0 : i32, i32, i32
  }
  func.func @transform_3(%arg0: i32) -> (i32, i32) {
    %c0_i32 = arith.constant 0 : i32
    %c0_i32_0 = arith.constant 0 : i32
    %c0_i32_1 = arith.constant 0 : i32
    return %c0_i32, %c0_i32_0 : i32, i32
  }
  func.func @transform_4(%arg0: i32) -> (i32, i32) {
    %c0_i32 = arith.constant 0 : i32
    %c0_i32_0 = arith.constant 0 : i32
    %c0_i32_1 = arith.constant 0 : i32
    return %c0_i32, %c0_i32_0 : i32, i32
  }
  func.func @transform_5(%arg0: i32) -> (i32, i32) {
    %c0_i32 = arith.constant 0 : i32
    %c0_i32_0 = arith.constant 0 : i32
    %c0_i32_1 = arith.constant 0 : i32
    return %c0_i32, %c0_i32_0 : i32, i32
  }
  func.func @transform_6(%arg0: i32) -> (i32, i32) {
    %c0_i32 = arith.constant 0 : i32
    %c0_i32_0 = arith.constant 0 : i32
    %c0_i32_1 = arith.constant 0 : i32
    return %c0_i32, %c0_i32_0 : i32, i32
  }
  func.func @transform_7(%arg0: i32) -> (i32, i32) {
    %c0_i32 = arith.constant 0 : i32
    %c0_i32_0 = arith.constant 0 : i32
    %c0_i32_1 = arith.constant 0 : i32
    return %c0_i32, %c0_i32_0 : i32, i32
  }
  func.func @transform_8(%arg0: i32) -> (i32, i32) {
    %c0_i32 = arith.constant 0 : i32
    %c0_i32_0 = arith.constant 0 : i32
    %c0_i32_1 = arith.constant 0 : i32
    return %c0_i32, %c0_i32_0 : i32, i32
  }
  func.func @transform_9(%arg0: i32) -> (i32, i32) {
    %c0_i32 = arith.constant 0 : i32
    %c0_i32_0 = arith.constant 0 : i32
    return %arg0, %c0_i32 : i32, i32
  }
}

</mosaic_0001>

<llo_original>
// kernel: tpu_custom_call.1
$region0: #{tpu_custom_call.1}
  #allocation0 [shape = 'u32[]', space=smem, size = 0x4, offset = 0x4, fixed_abs, tag = 'smem constant byte address 0x4 - core index']
  #allocation1 [shape = 'u32[144,128]{1,0:T(1,128)}', space=vmem, size = 0x12000, scoped, tag = 'internal scratch']
  #allocation2 [shape = 'f32[8,32]{1,0:T(8,128)}', space=vmem, size = 0x1000, scoped, tag = 'scratch operand']
  %s0 = inlined_call_operand.hbm [shape: f32[4,32], index: 0, kind: input, shape index: {}]
  %s1 = inlined_call_operand.hbm [shape: f32[4,32], index: 1, kind: input, shape index: {}]
  %s2 = inlined_call_operand.hbm [shape: f32[4,16,32], index: 2, kind: input, shape index: {}]
  %s3 = inlined_call_operand.hbm [shape: f32[32,32], index: 3, kind: input, shape index: {}]
  %s4 = inlined_call_operand.vmem [shape: f32[1,32], index: 4, kind: input, shape index: {}]
  %s5 = inlined_call_operand.hbm [shape: f32[32,32], index: 5, kind: input, shape index: {}]
  %s6 = inlined_call_operand.vmem [shape: f32[1,32], index: 6, kind: input, shape index: {}]
  %s7 = inlined_call_operand.hbm [shape: f32[32,32], index: 7, kind: input, shape index: {}]
  %s8 = inlined_call_operand.vmem [shape: f32[1,32], index: 8, kind: input, shape index: {}]
  %s9 = inlined_call_operand.hbm [shape: f32[16,32], index: 9, kind: output, shape index: {}]
  %s10 = sld [smem:[#allocation0]]
  $region93: #{tpu_custom_call.1} parent=0
    _
  %s12 = ssub.s32 1, %s10
  %s13 = scalar_select 0, %s12, %s10
  $region1: #{tpu_custom_call.1} parent=0
    #allocation3 [shape = 'u8[2048]{0}', space=vmem, size = 0x800, scoped, tag = 'input window, operand 0, single buffered']
    #allocation4 [shape = 's32[2]{0}', space=sflag, size = 0x8, scoped, tag = 'scoped memory for tpu_custom_call.1']
    #allocation5 [shape = 's32[2]{0}', space=sflag, size = 0x8, scoped, tag = 'scoped memory for tpu_custom_call.1']
    #allocation6 [shape = 'u8[2048]{0}', space=vmem, size = 0x800, scoped, tag = 'input window, operand 1, single buffered']
    #allocation7 [shape = 's32[1]{0}', space=sflag, size = 0x4, scoped, tag = 'scoped memory for tpu_custom_call.1']
    #allocation8 [shape = 'u8[32768]{0}', space=vmem, size = 0x8000, scoped, tag = 'input window, operand 2']
    #allocation9 [shape = 'u8[16384]{0}', space=vmem, size = 0x4000, scoped, tag = 'input window, operand 3, single buffered']
    #allocation10 [shape = 'u8[16384]{0}', space=vmem, size = 0x4000, scoped, tag = 'input window, operand 5, single buffered']
    #allocation11 [shape = 's32[1]{0}', space=sflag, size = 0x4, scoped, tag = 'scoped memory for tpu_custom_call.1']
    #allocation12 [shape = 'u8[16384]{0}', space=vmem, size = 0x4000, scoped, tag = 'input window, operand 7, single buffered']
    #allocation13 [shape = 'u8[8192]{0}', space=vmem, size = 0x2000, scoped, tag = 'output window, operand 0']
    %14 = vsyncpa [#allocation4], 0
    %15 = vsyncpa [#allocation7], 0
    %16 = vsyncpa [#allocation11], 0
    %17 = vsyncpa [#allocation5], 0
    %s18 = scalar_lea.sflag [#allocation5], 1
    %19 = vsyncpa %s18, 0
    loop: start=0, step=1, limit=4
    $region2: #{tpu_custom_call.1} parent=1 // loop_pre_header
      _
    $region3: #{tpu_custom_call.1} parent=1 // loop_header
      %s21 = sphi 0, %s25
      %p22 = scmp.ge.s32.totalorder %s21, 4
      %s29 = sphi 0, %s29
      %s31 = sphi 0, %s29
      %s32 = sphi 0, %s31
      %s46 = sphi 0, %s32
      %s50 = sphi 0, %s50
      %s52 = sphi 0, %s50
      %s53 = sphi 0, %s52
      %s67 = sphi 0, %s53
      %s73 = sphi 0, %s75
      %s76 = sphi 0, %s73
      %s77 = sphi 0, %s76
      %s93 = sphi 0, %s77
      %s97 = sphi 0, %s97
      %s99 = sphi 0, %s97
      %s100 = sphi 0, %s99
      %s114 = sphi 0, %s100
      %s118 = sphi 0, %s118
      %s120 = sphi 0, %s118
      %s121 = sphi 0, %s120
      %s135 = sphi 0, %s121
      %s139 = sphi 0, %s139
      %s141 = sphi 0, %s139
      %s142 = sphi 0, %s141
      %s156 = sphi 0, %s142
      %s160 = sphi 0, %s160
      %s162 = sphi 0, %s160
      %s163 = sphi 0, %s162
      %s177 = sphi 0, %s163
      %s181 = sphi 0, %s181
      %s183 = sphi 0, %s181
      %s184 = sphi 0, %s183
      %s198 = sphi 0, %s184
      %s202 = sphi 0, %s202
      %s204 = sphi 0, %s202
      %s205 = sphi 0, %s204
      %s219 = sphi 0, %s205
      %s225 = sphi 0, %s227
      %s228 = sphi 0, %s225
      %s229 = sphi 0, %s228
      %s245 = sphi 0, %s229
    $region4: #{tpu_custom_call.1} parent=1 // loop_header_branch
      %24 = sbr.rel (%p22) target = $region8
    $region5: #{tpu_custom_call.1} parent=1 // loop_body
      %s26 = ssub.s32 %s21, 1
      %s27 = ssub.s32 %s21, 2
      %s28 = sadd.s32 %s21, 1
      %s30 = sadd.s32 %s29, 1
      %p33 = scmp.eq.s32.totalorder %s21, 1
      %p34 = scmp.ne.s32.totalorder %s29, %s31
      %p35 = scmp.eq.s32.totalorder %s21, 0
      %p36 = por %p34, %p35
      %p37 = scmp.ne.s32.totalorder %s29, %s31
      %p38 = scmp.eq.s32.totalorder %s26, 1
      %p39 = por %p37, %p38
      %p40 = scmp.ne.s32.totalorder %s31, %s32
      %p41 = scmp.eq.s32.totalorder %s26, 0
      %p42 = por %p40, %p41
      %p43 = scmp.ne.s32.totalorder %s31, %s32
      %p44 = scmp.eq.s32.totalorder %s27, 1
      %p45 = por %p43, %p44
      %p47 = scmp.ne.s32.totalorder %s32, %s46
      %p48 = scmp.eq.s32.totalorder %s27, 0
      %p49 = por %p47, %p48
      %s51 = sadd.s32 %s50, 1
      %p54 = scmp.eq.s32.totalorder %s21, 1
      %p55 = scmp.ne.s32.totalorder %s50, %s52
      %p56 = scmp.eq.s32.totalorder %s21, 0
      %p57 = por %p55, %p56
      %p58 = scmp.ne.s32.totalorder %s50, %s52
      %p59 = scmp.eq.s32.totalorder %s26, 1
      %p60 = por %p58, %p59
      %p61 = scmp.ne.s32.totalorder %s52, %s53
      %p62 = scmp.eq.s32.totalorder %s26, 0
      %p63 = por %p61, %p62
      %p64 = scmp.ne.s32.totalorder %s52, %s53
      %p65 = scmp.eq.s32.totalorder %s27, 1
      %p66 = por %p64, %p65
      %p68 = scmp.ne.s32.totalorder %s53, %s67
      %p69 = scmp.eq.s32.totalorder %s27, 0
      %p70 = por %p68, %p69
      %s71 = ssub.s32 %s21, %s28
      %p72 = scmp.eq.s32.totalorder %s71, 0
      %s74 = sadd.s32 %s73, 1
      %s75 = scalar_select %p72, %s73, %s74
      %p78 = pneg %p72
      %p79 = scmp.eq.s32.totalorder %s21, 1
      %p80 = por %p78, %p79
      %p81 = scmp.ne.s32.totalorder %s73, %s76
      %p82 = scmp.eq.s32.totalorder %s21, 0
      %p83 = por %p81, %p82
      %p84 = scmp.ne.s32.totalorder %s73, %s76
      %p85 = scmp.eq.s32.totalorder %s26, 1
      %p86 = por %p84, %p85
      %p87 = scmp.ne.s32.totalorder %s76, %s77
      %p88 = scmp.eq.s32.totalorder %s26, 0
      %p89 = por %p87, %p88
      %p90 = scmp.ne.s32.totalorder %s76, %s77
      %p91 = scmp.eq.s32.totalorder %s27, 1
      %p92 = por %p90, %p91
      %p94 = scmp.ne.s32.totalorder %s77, %s93
      %p95 = scmp.eq.s32.totalorder %s27, 0
      %p96 = por %p94, %p95
      %s98 = sadd.s32 %s97, 1
      %p101 = scmp.eq.s32.totalorder %s21, 1
      %p102 = scmp.ne.s32.totalorder %s97, %s99
      %p103 = scmp.eq.s32.totalorder %s21, 0
      %p104 = por %p102, %p103
      %p105 = scmp.ne.s32.totalorder %s97, %s99
      %p106 = scmp.eq.s32.totalorder %s26, 1
      %p107 = por %p105, %p106
      %p108 = scmp.ne.s32.totalorder %s99, %s100
      %p109 = scmp.eq.s32.totalorder %s26, 0
      %p110 = por %p108, %p109
      %p111 = scmp.ne.s32.totalorder %s99, %s100
      %p112 = scmp.eq.s32.totalorder %s27, 1
      %p113 = por %p111, %p112
      %p115 = scmp.ne.s32.totalorder %s100, %s114
      %p116 = scmp.eq.s32.totalorder %s27, 0
      %p117 = por %p115, %p116
      %s119 = sadd.s32 %s118, 1
      %p122 = scmp.eq.s32.totalorder %s21, 1
      %p123 = scmp.ne.s32.totalorder %s118, %s120
      %p124 = scmp.eq.s32.totalorder %s21, 0
      %p125 = por %p123, %p124
      %p126 = scmp.ne.s32.totalorder %s118, %s120
      %p127 = scmp.eq.s32.totalorder %s26, 1
      %p128 = por %p126, %p127
      %p129 = scmp.ne.s32.totalorder %s120, %s121
      %p130 = scmp.eq.s32.totalorder %s26, 0
      %p131 = por %p129, %p130
      %p132 = scmp.ne.s32.totalorder %s120, %s121
      %p133 = scmp.eq.s32.totalorder %s27, 1
      %p134 = por %p132, %p133
      %p136 = scmp.ne.s32.totalorder %s121, %s135
      %p137 = scmp.eq.s32.totalorder %s27, 0
      %p138 = por %p136, %p137
      %s140 = sadd.s32 %s139, 1
      %p143 = scmp.eq.s32.totalorder %s21, 1
      %p144 = scmp.ne.s32.totalorder %s139, %s141
      %p145 = scmp.eq.s32.totalorder %s21, 0
      %p146 = por %p144, %p145
      %p147 = scmp.ne.s32.totalorder %s139, %s141
      %p148 = scmp.eq.s32.totalorder %s26, 1
      %p149 = por %p147, %p148
      %p150 = scmp.ne.s32.totalorder %s141, %s142
      %p151 = scmp.eq.s32.totalorder %s26, 0
      %p152 = por %p150, %p151
      %p153 = scmp.ne.s32.totalorder %s141, %s142
      %p154 = scmp.eq.s32.totalorder %s27, 1
      %p155 = por %p153, %p154
      %p157 = scmp.ne.s32.totalorder %s142, %s156
      %p158 = scmp.eq.s32.totalorder %s27, 0
      %p159 = por %p157, %p158
      %s161 = sadd.s32 %s160, 1
      %p164 = scmp.eq.s32.totalorder %s21, 1
      %p165 = scmp.ne.s32.totalorder %s160, %s162
      %p166 = scmp.eq.s32.totalorder %s21, 0
      %p167 = por %p165, %p166
      %p168 = scmp.ne.s32.totalorder %s160, %s162
      %p169 = scmp.eq.s32.totalorder %s26, 1
      %p170 = por %p168, %p169
      %p171 = scmp.ne.s32.totalorder %s162, %s163
      %p172 = scmp.eq.s32.totalorder %s26, 0
      %p173 = por %p171, %p172
      %p174 = scmp.ne.s32.totalorder %s162, %s163
      %p175 = scmp.eq.s32.totalorder %s27, 1
      %p176 = por %p174, %p175
      %p178 = scmp.ne.s32.totalorder %s163, %s177
      %p179 = scmp.eq.s32.totalorder %s27, 0
      %p180 = por %p178, %p179
      %s182 = sadd.s32 %s181, 1
      %p185 = scmp.eq.s32.totalorder %s21, 1
      %p186 = scmp.ne.s32.totalorder %s181, %s183
      %p187 = scmp.eq.s32.totalorder %s21, 0
      %p188 = por %p186, %p187
      %p189 = scmp.ne.s32.totalorder %s181, %s183
      %p190 = scmp.eq.s32.totalorder %s26, 1
      %p191 = por %p189, %p190
      %p192 = scmp.ne.s32.totalorder %s183, %s184
      %p193 = scmp.eq.s32.totalorder %s26, 0
      %p194 = por %p192, %p193
      %p195 = scmp.ne.s32.totalorder %s183, %s184
      %p196 = scmp.eq.s32.totalorder %s27, 1
      %p197 = por %p195, %p196
      %p199 = scmp.ne.s32.totalorder %s184, %s198
      %p200 = scmp.eq.s32.totalorder %s27, 0
      %p201 = por %p199, %p200
      %s203 = sadd.s32 %s202, 1
      %p206 = scmp.eq.s32.totalorder %s21, 1
      %p207 = scmp.ne.s32.totalorder %s202, %s204
      %p208 = scmp.eq.s32.totalorder %s21, 0
      %p209 = por %p207, %p208
      %p210 = scmp.ne.s32.totalorder %s202, %s204
      %p211 = scmp.eq.s32.totalorder %s26, 1
      %p212 = por %p210, %p211
      %p213 = scmp.ne.s32.totalorder %s204, %s205
      %p214 = scmp.eq.s32.totalorder %s26, 0
      %p215 = por %p213, %p214
      %p216 = scmp.ne.s32.totalorder %s204, %s205
      %p217 = scmp.eq.s32.totalorder %s27, 1
      %p218 = por %p216, %p217
      %p220 = scmp.ne.s32.totalorder %s205, %s219
      %p221 = scmp.eq.s32.totalorder %s27, 0
      %p222 = por %p220, %p221
      %s223 = ssub.s32 %s21, %s28
      %p224 = scmp.eq.s32.totalorder %s223, 0
      %s226 = sadd.s32 %s225, 1
      %s227 = scalar_select %p224, %s225, %s226
      %p230 = pneg %p224
      %p231 = scmp.eq.s32.totalorder %s21, 1
      %p232 = por %p230, %p231
      %p233 = scmp.ne.s32.totalorder %s225, %s228
      %p234 = scmp.eq.s32.totalorder %s21, 0
      %p235 = por %p233, %p234
      %p236 = scmp.ne.s32.totalorder %s225, %s228
      %p237 = scmp.eq.s32.totalorder %s26, 1
      %p238 = por %p236, %p237
      %p239 = scmp.ne.s32.totalorder %s228, %s229
      %p240 = scmp.eq.s32.totalorder %s26, 0
      %p241 = por %p239, %p240
      %p242 = scmp.ne.s32.totalorder %s228, %s229
      %p243 = scmp.eq.s32.totalorder %s27, 1
      %p244 = por %p242, %p243
      %p246 = scmp.ne.s32.totalorder %s229, %s245
      %p247 = scmp.eq.s32.totalorder %s27, 0
      %p248 = por %p246, %p247
      %p249 = scmp.le.s32.totalorder 1, %s21
      %p250 = scmp.lt.s32.totalorder %s21, 3
      %p251 = pnand %p249, %p250
      %p252 = pneg %p251
      // Predicated region
      $region9: #{tpu_custom_call.1} parent=5 // pred_check
        _
      $region10: #{tpu_custom_call.1} parent=5 // pred_check_branch
        %254 = sbr.rel (%p251) target = $region12
      $region11: #{tpu_custom_call.1} parent=5 // pred_region
        %s255 = ssub.s32 %s21, 1
        // Predicated region
        $region13: #{tpu_custom_call.1} parent=11 // pred_check
          %p256 = pneg %p42
        $region14: #{tpu_custom_call.1} parent=11 // pred_check_branch
          %258 = sbr.rel (%p256) target = $region16
        $region15: #{tpu_custom_call.1} parent=11 // pred_region
          %s260 = ssub.s32 64, 64
          %261 = vsyncadd [#allocation4], %s260
          %s263 = sshll.u32 [#allocation3], 4
          %s264 = int_to_ptr.vmem [resolvable:$true] %s263
          %266 = dma.hbm_to_vmem [thread:$0]  %s0, 64, %s264, [#allocation4]
        $region16: #{tpu_custom_call.1} parent=11 // pred_fallthru
          _
        // Predicated region
        $region17: #{tpu_custom_call.1} parent=11 // pred_check
          %p267 = pneg %p63
        $region18: #{tpu_custom_call.1} parent=11 // pred_check_branch
          %269 = sbr.rel (%p267) target = $region20
        $region19: #{tpu_custom_call.1} parent=11 // pred_region
          %s271 = ssub.s32 64, 64
          %272 = vsyncadd [#allocation7], %s271
          %s274 = sshll.u32 [#allocation6], 4
          %s275 = int_to_ptr.vmem [resolvable:$true] %s274
          %277 = dma.hbm_to_vmem [thread:$0]  %s1, 64, %s275, [#allocation7]
        $region20: #{tpu_custom_call.1} parent=11 // pred_fallthru
          _
        // Predicated region
        $region21: #{tpu_custom_call.1} parent=11 // pred_check
          %p278 = pneg %p110
        $region22: #{tpu_custom_call.1} parent=11 // pred_check_branch
          %280 = sbr.rel (%p278) target = $region24
        $region23: #{tpu_custom_call.1} parent=11 // pred_region
          %s282 = ssub.s32 512, 512
          %283 = vsyncadd [#allocation7], %s282
          %s284 = sshll.u32 [#allocation9], 4
          %s285 = int_to_ptr.vmem [resolvable:$true] %s284
          %290 = dma.hbm_to_vmem [thread:$0]  %s3, 512, %s285, [#allocation7], 128, 128, 8
        $region24: #{tpu_custom_call.1} parent=11 // pred_fallthru
          _
        // Predicated region
        $region25: #{tpu_custom_call.1} parent=11 // pred_check
          %p291 = pneg %p131
        $region26: #{tpu_custom_call.1} parent=11 // pred_check_branch
          %293 = sbr.rel (%p291) target = $region28
        $region27: #{tpu_custom_call.1} parent=11 // pred_region
          _
        $region28: #{tpu_custom_call.1} parent=11 // pred_fallthru
          _
        // Predicated region
        $region29: #{tpu_custom_call.1} parent=11 // pred_check
          %p294 = pneg %p152
        $region30: #{tpu_custom_call.1} parent=11 // pred_check_branch
          %296 = sbr.rel (%p294) target = $region32
        $region31: #{tpu_custom_call.1} parent=11 // pred_region
          %s298 = ssub.s32 512, 512
          %299 = vsyncadd [#allocation11], %s298
          %s300 = sshll.u32 [#allocation10], 4
          %s301 = int_to_ptr.vmem [resolvable:$true] %s300
          %306 = dma.hbm_to_vmem [thread:$0]  %s5, 512, %s301, [#allocation11], 128, 128, 8
        $region32: #{tpu_custom_call.1} parent=11 // pred_fallthru
          _
        // Predicated region
        $region33: #{tpu_custom_call.1} parent=11 // pred_check
          %p307 = pneg %p173
        $region34: #{tpu_custom_call.1} parent=11 // pred_check_branch
          %309 = sbr.rel (%p307) target = $region36
        $region35: #{tpu_custom_call.1} parent=11 // pred_region
          _
        $region36: #{tpu_custom_call.1} parent=11 // pred_fallthru
          _
        // Predicated region
        $region37: #{tpu_custom_call.1} parent=11 // pred_check
          %p310 = pneg %p194
        $region38: #{tpu_custom_call.1} parent=11 // pred_check_branch
          %312 = sbr.rel (%p310) target = $region40
        $region39: #{tpu_custom_call.1} parent=11 // pred_region
          %s314 = ssub.s32 512, 512
          %315 = vsyncadd [#allocation11], %s314
          %s316 = sshll.u32 [#allocation12], 4
          %s317 = int_to_ptr.vmem [resolvable:$true] %s316
          %322 = dma.hbm_to_vmem [thread:$0]  %s7, 512, %s317, [#allocation11], 128, 128, 8
        $region40: #{tpu_custom_call.1} parent=11 // pred_fallthru
          _
        // Predicated region
        $region41: #{tpu_custom_call.1} parent=11 // pred_check
          %p323 = pneg %p215
        $region42: #{tpu_custom_call.1} parent=11 // pred_check_branch
          %325 = sbr.rel (%p323) target = $region44
        $region43: #{tpu_custom_call.1} parent=11 // pred_region
          _
        $region44: #{tpu_custom_call.1} parent=11 // pred_fallthru
          _
      $region12: #{tpu_custom_call.1} parent=5 // pred_fallthru
        _
      %p326 = scmp.lt.s32.totalorder %s21, 2
      // Predicated region
      $region45: #{tpu_custom_call.1} parent=5 // pred_check
        %p327 = pneg %p326
      $region46: #{tpu_custom_call.1} parent=5 // pred_check_branch
        %329 = sbr.rel (%p327) target = $region48
      $region47: #{tpu_custom_call.1} parent=5 // pred_region
        // Predicated region
        $region49: #{tpu_custom_call.1} parent=47 // pred_check
          %p330 = pneg %p83
        $region50: #{tpu_custom_call.1} parent=47 // pred_check_branch
          %332 = sbr.rel (%p330) target = $region52
        $region51: #{tpu_custom_call.1} parent=47 // pred_region
          %s333 = sand.u32 %s21, 1
          %s334 = scalar_lea.sflag [#allocation4], %s333
          %s335 = sand.u32 %s73, 1
          %s336 = smul.addr %s335, 32
          %s337 = scalar_lea.vmem [#allocation8], %s336
          %s338 = smul.u32 2, %s21
          %s340 = ssub.s32 512, 512
          %341 = vsyncadd %s334, %s340
          %s342 = smul.addr %s338, 2
          %s343 = smul.addr %s342, 128
          %s344 = scalar_lea.hbm %s2, %s343
          %s345 = sshll.u32 %s337, 4
          %s346 = int_to_ptr.vmem [resolvable:$true] %s345
          %351 = dma.hbm_to_vmem [thread:$0]  %s344, 512, %s346, %s334, 128, 128, 8
        $region52: #{tpu_custom_call.1} parent=47 // pred_fallthru
          _
      $region48: #{tpu_custom_call.1} parent=5 // pred_fallthru
        _
      %p352 = scmp.le.s32.totalorder 1, %s21
      %p353 = scmp.lt.s32.totalorder %s21, 3
      %p354 = pnand %p352, %p353
      %p355 = pneg %p354
      // Predicated region
      $region53: #{tpu_custom_call.1} parent=5 // pred_check
        _
      $region54: #{tpu_custom_call.1} parent=5 // pred_check_branch
        %357 = sbr.rel (%p354) target = $region56
      $region55: #{tpu_custom_call.1} parent=5 // pred_region
        %s358 = ssub.s32 %s21, 1
        // Predicated region
        $region57: #{tpu_custom_call.1} parent=55 // pred_check
          %p359 = pneg %p42
        $region58: #{tpu_custom_call.1} parent=55 // pred_check_branch
          %361 = sbr.rel (%p359) target = $region60
        $region59: #{tpu_custom_call.1} parent=55 // pred_region
          %362 = dma.done [#allocation4], 64
        $region60: #{tpu_custom_call.1} parent=55 // pred_fallthru
          _
        // Predicated region
        $region61: #{tpu_custom_call.1} parent=55 // pred_check
          %p363 = pneg %p63
        $region62: #{tpu_custom_call.1} parent=55 // pred_check_branch
          %365 = sbr.rel (%p363) target = $region64
        $region63: #{tpu_custom_call.1} parent=55 // pred_region
          %366 = dma.done [#allocation7], 64
        $region64: #{tpu_custom_call.1} parent=55 // pred_fallthru
          _
        %s367 = sand.u32 %s26, 1
        %s368 = scalar_lea.sflag [#allocation4], %s367
        %s369 = sand.u32 %s76, 1
        %s370 = smul.addr %s369, 32
        %s371 = scalar_lea.vmem [#allocation8], %s370
        // Predicated region
        $region65: #{tpu_custom_call.1} parent=55 // pred_check
          %p372 = pneg %p89
        $region66: #{tpu_custom_call.1} parent=55 // pred_check_branch
          %374 = sbr.rel (%p372) target = $region68
        $region67: #{tpu_custom_call.1} parent=55 // pred_region
          %375 = dma.done %s368, 512
        $region68: #{tpu_custom_call.1} parent=55 // pred_fallthru
          _
        // Predicated region
        $region69: #{tpu_custom_call.1} parent=55 // pred_check
          %p376 = pneg %p110
        $region70: #{tpu_custom_call.1} parent=55 // pred_check_branch
          %378 = sbr.rel (%p376) target = $region72
        $region71: #{tpu_custom_call.1} parent=55 // pred_region
          %379 = dma.done [#allocation7], 512
        $region72: #{tpu_custom_call.1} parent=55 // pred_fallthru
          _
        // Predicated region
        $region73: #{tpu_custom_call.1} parent=55 // pred_check
          %p380 = pneg %p152
        $region74: #{tpu_custom_call.1} parent=55 // pred_check_branch
          %382 = sbr.rel (%p380) target = $region76
        $region75: #{tpu_custom_call.1} parent=55 // pred_region
          %383 = dma.done [#allocation11], 512
        $region76: #{tpu_custom_call.1} parent=55 // pred_fallthru
          _
        // Predicated region
        $region77: #{tpu_custom_call.1} parent=55 // pred_check
          %p384 = pneg %p194
        $region78: #{tpu_custom_call.1} parent=55 // pred_check_branch
          %386 = sbr.rel (%p384) target = $region80
        $region79: #{tpu_custom_call.1} parent=55 // pred_region
          %387 = dma.done [#allocation11], 512
        $region80: #{tpu_custom_call.1} parent=55 // pred_fallthru
          _
        %p388 = pneg %p42
        %p389 = pneg %p39
        %p390 = pneg %p63
        %p391 = pneg %p60
        %s392 = sand.u32 %s26, 1
        %s393 = scalar_lea.sflag [#allocation4], %s392
        %s394 = sand.u32 %s76, 1
        %s395 = smul.addr %s394, 32
        %s396 = scalar_lea.vmem [#allocation8], %s395
        %p397 = pneg %p89
        %p398 = pneg %p86
        %p399 = pneg %p110
        %p400 = pneg %p107
        %p401 = pneg %p131
        %p402 = pneg %p128
        %p403 = pneg %p152
        %p404 = pneg %p149
        %p405 = pneg %p173
        %p406 = pneg %p170
        %p407 = pneg %p194
        %p408 = pneg %p191
        %p409 = pneg %p215
        %p410 = pneg %p212
        %p411 = pneg %p241
        %p412 = pneg %p238
        %s413 = sand.u32 %s228, 1
        %s414 = scalar_lea.sflag [#allocation5], %s413
        %s415 = sand.u32 %s228, 1
        %s416 = smul.addr %s415, 8
        %s417 = scalar_lea.vmem [#allocation13], %s416
        %s418 = smul.u32 2, %s26
        %v419 = vld [vmem:[%s371] sm:$0xff]
        %v420 = vld [vmem:[%s371 + $0x8] sm:$0xff]
        %v421 = vld [vmem:[%s371 + $0x10] sm:$0xff]
        %v422 = vld [vmem:[%s371 + $0x18] sm:$0xff]
        %v423 = vld [vmem:[#allocation9] sm:$0xff]
        %v424 = vld [vmem:[#allocation9 + $0x8] sm:$0xff]
        %v425 = vld [vmem:[#allocation9 + $0x10] sm:$0xff]
        %v426 = vld [vmem:[#allocation9 + $0x18] sm:$0xff]
        %v427 = vld [vmem:[%s4] sm:$0x1]
        %v429 = vlaneseq
        %v430 = vshrl.u32 %v429, 7
        %v431 = vsub.s32 0, %v430
        %v432 = vrot.slane %v427, %v431
        %vm434 = vcmask 261120
        %v436 = vsel %vm434, %v419, 0
        %v439 = vsel %vm434, %v420, 0
        %v442 = vsel %vm434, %v421, 0
        %v445 = vsel %vm434, %v422, 0
        %447 = vmatprep.subr.mxu0 0.0
        %448 = vmatpush1.msra.mxu0 0.0
        %449 = vmatprep.subr.mxu0 0.0
        %450 = vmatpush1.msra.mxu0 0.0
        %451 = vmatprep.subr.mxu0 0.0
        %452 = vmatpush1.msra.mxu0 0.0
        %453 = vmatprep.subr.mxu0 0.0
        %454 = vmatpush1.msra.mxu0 0.0
        %455 = vmatprep.subr.mxu0 0.0
        %456 = vmatpush1.msra.mxu0 0.0
        %457 = vmatprep.subr.mxu0 0.0
        %458 = vmatpush1.msra.mxu0 0.0
        %459 = vmatprep.subr.mxu0 0.0
        %460 = vmatpush1.msra.mxu0 0.0
        %461 = vmatprep.subr.mxu0 0.0
        %462 = vmatpush1.msra.mxu0 0.0
        %463 = vmatprep.subr.mxu0 0.0
        %464 = vmatpush1.msra.mxu0 0.0
        %465 = vmatprep.subr.mxu0 0.0
        %466 = vmatpush1.msra.mxu0 0.0
        %467 = vmatprep.subr.mxu0 0.0
        %468 = vmatpush1.msra.mxu0 0.0
        %469 = vmatprep.subr.mxu0 0.0
        %470 = vmatpush1.msra.mxu0 0.0
        %471 = vmatprep.subr.mxu0 0.0
        %472 = vmatpush1.msra.mxu0 %v426
        %473 = vmatprep.subr.mxu0 0.0
        %474 = vmatpush1.msra.mxu0 %v425
        %475 = vmatprep.subr.mxu0 0.0
        %476 = vmatpush1.msra.mxu0 %v424
        %477 = vmatprep.subr.mxu0 0.0
        %478 = vmatpush1.msra.mxu0 %v423
        %479 = vmatprep.subr.mxu0 0.0
        %480 = vmatpush2.msra.mxu0 0.0
        %481 = vmatprep.subr.mxu0 0.0
        %482 = vmatpush2.msra.mxu0 0.0
        %483 = vmatprep.subr.mxu0 0.0
        %484 = vmatpush2.msra.mxu0 0.0
        %485 = vmatprep.subr.mxu0 0.0
        %486 = vmatpush2.msra.mxu0 0.0
        %487 = vmatprep.subr.mxu0 0.0
        %488 = vmatpush2.msra.mxu0 0.0
        %489 = vmatprep.subr.mxu0 0.0
        %490 = vmatpush2.msra.mxu0 0.0
        %491 = vmatprep.subr.mxu0 0.0
        %492 = vmatpush2.msra.mxu0 0.0
        %493 = vmatprep.subr.mxu0 0.0
        %494 = vmatpush2.msra.mxu0 0.0
        %495 = vmatprep.subr.mxu0 0.0
        %496 = vmatpush2.msra.mxu0 0.0
        %497 = vmatprep.subr.mxu0 0.0
        %498 = vmatpush2.msra.mxu0 0.0
        %499 = vmatprep.subr.mxu0 0.0
        %500 = vmatpush2.msra.mxu0 0.0
        %501 = vmatprep.subr.mxu0 0.0
        %502 = vmatpush2.msra.mxu0 0.0
        %503 = vmatprep.subr.mxu0 0.0
        %504 = vmatpush2.msra.mxu0 0.0
        %505 = vmatprep.subr.mxu0 0.0
        %506 = vmatpush2.msra.mxu0 0.0
        %507 = vmatprep.subr.mxu0 0.0
        %508 = vmatpush2.msra.mxu0 0.0
        %509 = vmatprep.subr.mxu0 0.0
        %510 = vmatpush2.msra.mxu0 0.0
        %511 = vmatprep.mubr.f32.mxu0 0.0
        %512 = vmatmul.mubr.f32.gmra.mxu0 %v436
        %v513 = vpop.f32.mrf.mxu0
        %v514 = vadd.f32 %v432, %v513
        %v515 = vpop.f32.mrf.mxu0
        %516 = vmatprep.mubr.f32.mxu0 0.0
        %517 = vmatmul.mubr.f32.gmra.mxu0 %v439
        %v518 = vpop.f32.mrf.mxu0
        %v519 = vadd.f32 %v432, %v518
        %v520 = vpop.f32.mrf.mxu0
        %521 = vmatprep.mubr.f32.mxu0 0.0
        %522 = vmatmul.mubr.f32.gmra.mxu0 %v442
        %v523 = vpop.f32.mrf.mxu0
        %v524 = vadd.f32 %v432, %v523
        %v525 = vpop.f32.mrf.mxu0
        %526 = vmatprep.mubr.f32.mxu0 0.0
        %527 = vmatmul.mubr.f32.gmra.mxu0 %v445
        %v528 = vpop.f32.mrf.mxu0
        %v529 = vadd.f32 %v432, %v528
        %v530 = vpop.f32.mrf.mxu0
        %531 = vdwg.mxu0
        %v532 = vld [vmem:[#allocation10] sm:$0xff]
        %v533 = vld [vmem:[#allocation10 + $0x8] sm:$0xff]
        %v534 = vld [vmem:[#allocation10 + $0x10] sm:$0xff]
        %v535 = vld [vmem:[#allocation10 + $0x18] sm:$0xff]
        %v536 = vld [vmem:[%s6] sm:$0x1]
        %v538 = vlaneseq
        %v539 = vshrl.u32 %v538, 7
        %v540 = vsub.s32 0, %v539
        %v541 = vrot.slane %v536, %v540
        %543 = vmatprep.subr.mxu0 0.0
        %544 = vmatpush1.msra.mxu0 0.0
        %545 = vmatprep.subr.mxu0 0.0
        %546 = vmatpush1.msra.mxu0 0.0
        %547 = vmatprep.subr.mxu0 0.0
        %548 = vmatpush1.msra.mxu0 0.0
        %549 = vmatprep.subr.mxu0 0.0
        %550 = vmatpush1.msra.mxu0 0.0
        %551 = vmatprep.subr.mxu0 0.0
        %552 = vmatpush1.msra.mxu0 0.0
        %553 = vmatprep.subr.mxu0 0.0
        %554 = vmatpush1.msra.mxu0 0.0
        %555 = vmatprep.subr.mxu0 0.0
        %556 = vmatpush1.msra.mxu0 0.0
        %557 = vmatprep.subr.mxu0 0.0
        %558 = vmatpush1.msra.mxu0 0.0
        %559 = vmatprep.subr.mxu0 0.0
        %560 = vmatpush1.msra.mxu0 0.0
        %561 = vmatprep.subr.mxu0 0.0
        %562 = vmatpush1.msra.mxu0 0.0
        %563 = vmatprep.subr.mxu0 0.0
        %564 = vmatpush1.msra.mxu0 0.0
        %565 = vmatprep.subr.mxu0 0.0
        %566 = vmatpush1.msra.mxu0 0.0
        %567 = vmatprep.subr.mxu0 0.0
        %568 = vmatpush1.msra.mxu0 %v535
        %569 = vmatprep.subr.mxu0 0.0
        %570 = vmatpush1.msra.mxu0 %v534
        %571 = vmatprep.subr.mxu0 0.0
        %572 = vmatpush1.msra.mxu0 %v533
        %573 = vmatprep.subr.mxu0 0.0
        %574 = vmatpush1.msra.mxu0 %v532
        %575 = vmatprep.subr.mxu0 0.0
        %576 = vmatpush2.msra.mxu0 0.0
        %577 = vmatprep.subr.mxu0 0.0
        %578 = vmatpush2.msra.mxu0 0.0
        %579 = vmatprep.subr.mxu0 0.0
        %580 = vmatpush2.msra.mxu0 0.0
        %581 = vmatprep.subr.mxu0 0.0
        %582 = vmatpush2.msra.mxu0 0.0
        %583 = vmatprep.subr.mxu0 0.0
        %584 = vmatpush2.msra.mxu0 0.0
        %585 = vmatprep.subr.mxu0 0.0
        %586 = vmatpush2.msra.mxu0 0.0
        %587 = vmatprep.subr.mxu0 0.0
        %588 = vmatpush2.msra.mxu0 0.0
        %589 = vmatprep.subr.mxu0 0.0
        %590 = vmatpush2.msra.mxu0 0.0
        %591 = vmatprep.subr.mxu0 0.0
        %592 = vmatpush2.msra.mxu0 0.0
        %593 = vmatprep.subr.mxu0 0.0
        %594 = vmatpush2.msra.mxu0 0.0
        %595 = vmatprep.subr.mxu0 0.0
        %596 = vmatpush2.msra.mxu0 0.0
        %597 = vmatprep.subr.mxu0 0.0
        %598 = vmatpush2.msra.mxu0 0.0
        %599 = vmatprep.subr.mxu0 0.0
        %600 = vmatpush2.msra.mxu0 0.0
        %601 = vmatprep.subr.mxu0 0.0
        %602 = vmatpush2.msra.mxu0 0.0
        %603 = vmatprep.subr.mxu0 0.0
        %604 = vmatpush2.msra.mxu0 0.0
        %605 = vmatprep.subr.mxu0 0.0
        %606 = vmatpush2.msra.mxu0 0.0
        %607 = vmatprep.mubr.f32.mxu0 0.0
        %608 = vmatmul.mubr.f32.gmra.mxu0 %v436
        %v609 = vpop.f32.mrf.mxu0
        %v610 = vadd.f32 %v541, %v609
        %v611 = vpop.f32.mrf.mxu0
        %612 = vmatprep.mubr.f32.mxu0 0.0
        %613 = vmatmul.mubr.f32.gmra.mxu0 %v439
        %v614 = vpop.f32.mrf.mxu0
        %v615 = vadd.f32 %v541, %v614
        %v616 = vpop.f32.mrf.mxu0
        %617 = vmatprep.mubr.f32.mxu0 0.0
        %618 = vmatmul.mubr.f32.gmra.mxu0 %v442
        %v619 = vpop.f32.mrf.mxu0
        %v620 = vadd.f32 %v541, %v619
        %v621 = vpop.f32.mrf.mxu0
        %622 = vmatprep.mubr.f32.mxu0 0.0
        %623 = vmatmul.mubr.f32.gmra.mxu0 %v445
        %v624 = vpop.f32.mrf.mxu0
        %v625 = vadd.f32 %v541, %v624
        %v626 = vpop.f32.mrf.mxu0
        %627 = vdwg.mxu0
        %v628 = vld [vmem:[#allocation3] sm:$0xf]
        %v629 = vld [vmem:[#allocation6] sm:$0xf]
        %vm630 = vcmask 64512
        %v632 = vsel %vm630, %v629, 0
        %v635 = vsel %vm630, %v514, 0
        %v638 = vsel %vm630, %v519, 0
        %640 = vmatprep.subr.mxu0 0.0
        %641 = vmatpush1.xpose.msra.mxu0 0.0
        %642 = vmatprep.subr.mxu0 0.0
        %643 = vmatpush1.xpose.msra.mxu0 0.0
        %644 = vmatprep.subr.mxu0 0.0
        %645 = vmatpush1.xpose.msra.mxu0 0.0
        %646 = vmatprep.subr.mxu0 0.0
        %647 = vmatpush1.xpose.msra.mxu0 0.0
        %648 = vmatprep.subr.mxu0 0.0
        %649 = vmatpush1.xpose.msra.mxu0 0.0
        %650 = vmatprep.subr.mxu0 0.0
        %651 = vmatpush1.xpose.msra.mxu0 0.0
        %652 = vmatprep.subr.mxu0 0.0
        %653 = vmatpush1.xpose.msra.mxu0 0.0
        %654 = vmatprep.subr.mxu0 0.0
        %655 = vmatpush1.xpose.msra.mxu0 0.0
        %656 = vmatprep.subr.mxu0 0.0
        %657 = vmatpush1.xpose.msra.mxu0 0.0
        %658 = vmatprep.subr.mxu0 0.0
        %659 = vmatpush1.xpose.msra.mxu0 0.0
        %660 = vmatprep.subr.mxu0 0.0
        %661 = vmatpush1.xpose.msra.mxu0 0.0
        %662 = vmatprep.subr.mxu0 0.0
        %663 = vmatpush1.xpose.msra.mxu0 0.0
        %664 = vmatprep.subr.mxu0 0.0
        %665 = vmatpush1.xpose.msra.mxu0 0.0
        %666 = vmatprep.subr.mxu0 0.0
        %667 = vmatpush1.xpose.msra.mxu0 0.0
        %668 = vmatprep.subr.mxu0 0.0
        %669 = vmatpush1.xpose.msra.mxu0 %v638
        %670 = vmatprep.subr.mxu0 0.0
        %671 = vmatpush1.xpose.msra.mxu0 %v635
        %672 = vmatprep.subr.mxu0 0.0
        %673 = vmatpush2.xpose.msra.mxu0 0.0
        %674 = vmatprep.subr.mxu0 0.0
        %675 = vmatpush2.xpose.msra.mxu0 0.0
        %676 = vmatprep.subr.mxu0 0.0
        %677 = vmatpush2.xpose.msra.mxu0 0.0
        %678 = vmatprep.subr.mxu0 0.0
        %679 = vmatpush2.xpose.msra.mxu0 0.0
        %680 = vmatprep.subr.mxu0 0.0
        %681 = vmatpush2.xpose.msra.mxu0 0.0
        %682 = vmatprep.subr.mxu0 0.0
        %683 = vmatpush2.xpose.msra.mxu0 0.0
        %684 = vmatprep.subr.mxu0 0.0
        %685 = vmatpush2.xpose.msra.mxu0 0.0
        %686 = vmatprep.subr.mxu0 0.0
        %687 = vmatpush2.xpose.msra.mxu0 0.0
        %688 = vmatprep.subr.mxu0 0.0
        %689 = vmatpush2.xpose.msra.mxu0 0.0
        %690 = vmatprep.subr.mxu0 0.0
        %691 = vmatpush2.xpose.msra.mxu0 0.0
        %692 = vmatprep.subr.mxu0 0.0
        %693 = vmatpush2.xpose.msra.mxu0 0.0
        %694 = vmatprep.subr.mxu0 0.0
        %695 = vmatpush2.xpose.msra.mxu0 0.0
        %696 = vmatprep.subr.mxu0 0.0
        %697 = vmatpush2.xpose.msra.mxu0 0.0
        %698 = vmatprep.subr.mxu0 0.0
        %699 = vmatpush2.xpose.msra.mxu0 0.0
        %700 = vmatprep.subr.mxu0 0.0
        %701 = vmatpush2.xpose.msra.mxu0 0.0
        %702 = vmatprep.subr.mxu0 0.0
        %703 = vmatpush2.xpose.msra.mxu0 0.0
        %704 = vmatprep.mubr.f32.mxu0 0.0
        %705 = vmatmul.mubr.f32.gmra.mxu0 %v632
        %v706 = vpop.f32.mrf.mxu0
        %v707 = vadd.f32 0.0, %v706
        %v708 = vpop.f32.mrf.mxu0
        %709 = vdwg.mxu0
        %v711 = vsel %vm630, %v524, 0
        %v714 = vsel %vm630, %v529, 0
        %716 = vmatprep.subr.mxu0 0.0
        %717 = vmatpush1.xpose.msra.mxu0 0.0
        %718 = vmatprep.subr.mxu0 0.0
        %719 = vmatpush1.xpose.msra.mxu0 0.0
        %720 = vmatprep.subr.mxu0 0.0
        %721 = vmatpush1.xpose.msra.mxu0 0.0
        %722 = vmatprep.subr.mxu0 0.0
        %723 = vmatpush1.xpose.msra.mxu0 0.0
        %724 = vmatprep.subr.mxu0 0.0
        %725 = vmatpush1.xpose.msra.mxu0 0.0
        %726 = vmatprep.subr.mxu0 0.0
        %727 = vmatpush1.xpose.msra.mxu0 0.0
        %728 = vmatprep.subr.mxu0 0.0
        %729 = vmatpush1.xpose.msra.mxu0 0.0
        %730 = vmatprep.subr.mxu0 0.0
        %731 = vmatpush1.xpose.msra.mxu0 0.0
        %732 = vmatprep.subr.mxu0 0.0
        %733 = vmatpush1.xpose.msra.mxu0 0.0
        %734 = vmatprep.subr.mxu0 0.0
        %735 = vmatpush1.xpose.msra.mxu0 0.0
        %736 = vmatprep.subr.mxu0 0.0
        %737 = vmatpush1.xpose.msra.mxu0 0.0
        %738 = vmatprep.subr.mxu0 0.0
        %739 = vmatpush1.xpose.msra.mxu0 0.0
        %740 = vmatprep.subr.mxu0 0.0
        %741 = vmatpush1.xpose.msra.mxu0 0.0
        %742 = vmatprep.subr.mxu0 0.0
        %743 = vmatpush1.xpose.msra.mxu0 0.0
        %744 = vmatprep.subr.mxu0 0.0
        %745 = vmatpush1.xpose.msra.mxu0 %v714
        %746 = vmatprep.subr.mxu0 0.0
        %747 = vmatpush1.xpose.msra.mxu0 %v711
        %748 = vmatprep.subr.mxu0 0.0
        %749 = vmatpush2.xpose.msra.mxu0 0.0
        %750 = vmatprep.subr.mxu0 0.0
        %751 = vmatpush2.xpose.msra.mxu0 0.0
        %752 = vmatprep.subr.mxu0 0.0
        %753 = vmatpush2.xpose.msra.mxu0 0.0
        %754 = vmatprep.subr.mxu0 0.0
        %755 = vmatpush2.xpose.msra.mxu0 0.0
        %756 = vmatprep.subr.mxu0 0.0
        %757 = vmatpush2.xpose.msra.mxu0 0.0
        %758 = vmatprep.subr.mxu0 0.0
        %759 = vmatpush2.xpose.msra.mxu0 0.0
        %760 = vmatprep.subr.mxu0 0.0
        %761 = vmatpush2.xpose.msra.mxu0 0.0
        %762 = vmatprep.subr.mxu0 0.0
        %763 = vmatpush2.xpose.msra.mxu0 0.0
        %764 = vmatprep.subr.mxu0 0.0
        %765 = vmatpush2.xpose.msra.mxu0 0.0
        %766 = vmatprep.subr.mxu0 0.0
        %767 = vmatpush2.xpose.msra.mxu0 0.0
        %768 = vmatprep.subr.mxu0 0.0
        %769 = vmatpush2.xpose.msra.mxu0 0.0
        %770 = vmatprep.subr.mxu0 0.0
        %771 = vmatpush2.xpose.msra.mxu0 0.0
        %772 = vmatprep.subr.mxu0 0.0
        %773 = vmatpush2.xpose.msra.mxu0 0.0
        %774 = vmatprep.subr.mxu0 0.0
        %775 = vmatpush2.xpose.msra.mxu0 0.0
        %776 = vmatprep.subr.mxu0 0.0
        %777 = vmatpush2.xpose.msra.mxu0 0.0
        %778 = vmatprep.subr.mxu0 0.0
        %779 = vmatpush2.xpose.msra.mxu0 0.0
        %780 = vmatprep.mubr.f32.mxu0 0.0
        %781 = vmatmul.mubr.f32.gmra.mxu0 %v632
        %v782 = vpop.f32.mrf.mxu0
        %v783 = vadd.f32 0.0, %v782
        %v784 = vpop.f32.mrf.mxu0
        %785 = vdwg.mxu0
        %vm786 = vcmask 125952
        %v787 = vsel %vm786, %v707, -inf
        %788 = vmax.xlane.f32.xlu0 %v787
        %v789 = vpop.xlane.xlu0 %788
        %v790 = vsel %vm786, %v783, -inf
        %791 = vmax.xlane.f32.xlu0 %v790
        %v792 = vpop.xlane.xlu0 %791
        %v793 = vsub.f32 %v707, %v789
        %v794 = vsub.f32 %v783, %v792
        %v795 = vmul.f32 %v793, 1.442695
        %v796 = vpow.pop %v795
        %v797 = vmul.f32 %v794, 1.442695
        %v798 = vpow.pop %v797
        %v799 = vsel %vm786, %v796, 0.0
        %800 = vadd.xlane.f32.xlu0 %v799
        %v801 = vpop.xlane.xlu0 %800
        %v802 = vsel %vm786, %v798, 0.0
        %803 = vadd.xlane.f32.xlu0 %v802
        %v804 = vpop.xlane.xlu0 %803
        %v805 = vrcp.pop %v801
        %v806 = vrcp.pop %v804
        %v807 = vmul.f32 %v801, %v805
        %v808 = vmul.f32 %v804, %v806
        %v809 = vsub.f32 2.0, %v807
        %v810 = vsub.f32 2.0, %v808
        %v811 = vmul.f32 %v805, %v809
        %v812 = vmul.f32 %v806, %v810
        %v813 = vmul.f32 %v801, %v811
        %v814 = vmul.f32 %v804, %v812
        %v815 = vsub.f32 2.0, %v813
        %v816 = vsub.f32 2.0, %v814
        %v817 = vmul.f32 %v811, %v815
        %v818 = vmul.f32 %v812, %v816
        %v819 = vmul.f32 %v796, %v817
        %v820 = vmul.f32 %v798, %v818
        %vm821 = vcmask 130048
        %v823 = vsel %vm821, %v819, 0
        %825 = vmatprep.subr.mxu0 0.0
        %826 = vmatpush1.msra.mxu0 0.0
        %827 = vmatprep.subr.mxu0 0.0
        %828 = vmatpush1.msra.mxu0 0.0
        %829 = vmatprep.subr.mxu0 0.0
        %830 = vmatpush1.msra.mxu0 0.0
        %831 = vmatprep.subr.mxu0 0.0
        %832 = vmatpush1.msra.mxu0 0.0
        %833 = vmatprep.subr.mxu0 0.0
        %834 = vmatpush1.msra.mxu0 0.0
        %835 = vmatprep.subr.mxu0 0.0
        %836 = vmatpush1.msra.mxu0 0.0
        %837 = vmatprep.subr.mxu0 0.0
        %838 = vmatpush1.msra.mxu0 0.0
        %839 = vmatprep.subr.mxu0 0.0
        %840 = vmatpush1.msra.mxu0 0.0
        %841 = vmatprep.subr.mxu0 0.0
        %842 = vmatpush1.msra.mxu0 0.0
        %843 = vmatprep.subr.mxu0 0.0
        %844 = vmatpush1.msra.mxu0 0.0
        %845 = vmatprep.subr.mxu0 0.0
        %846 = vmatpush1.msra.mxu0 0.0
        %847 = vmatprep.subr.mxu0 0.0
        %848 = vmatpush1.msra.mxu0 0.0
        %849 = vmatprep.subr.mxu0 0.0
        %850 = vmatpush1.msra.mxu0 0.0
        %851 = vmatprep.subr.mxu0 0.0
        %852 = vmatpush1.msra.mxu0 0.0
        %853 = vmatprep.subr.mxu0 0.0
        %854 = vmatpush1.msra.mxu0 %v615
        %855 = vmatprep.subr.mxu0 0.0
        %856 = vmatpush1.msra.mxu0 %v610
        %857 = vmatprep.subr.mxu0 0.0
        %858 = vmatpush2.msra.mxu0 0.0
        %859 = vmatprep.subr.mxu0 0.0
        %860 = vmatpush2.msra.mxu0 0.0
        %861 = vmatprep.subr.mxu0 0.0
        %862 = vmatpush2.msra.mxu0 0.0
        %863 = vmatprep.subr.mxu0 0.0
        %864 = vmatpush2.msra.mxu0 0.0
        %865 = vmatprep.subr.mxu0 0.0
        %866 = vmatpush2.msra.mxu0 0.0
        %867 = vmatprep.subr.mxu0 0.0
        %868 = vmatpush2.msra.mxu0 0.0
        %869 = vmatprep.subr.mxu0 0.0
        %870 = vmatpush2.msra.mxu0 0.0
        %871 = vmatprep.subr.mxu0 0.0
        %872 = vmatpush2.msra.mxu0 0.0
        %873 = vmatprep.subr.mxu0 0.0
        %874 = vmatpush2.msra.mxu0 0.0
        %875 = vmatprep.subr.mxu0 0.0
        %876 = vmatpush2.msra.mxu0 0.0
        %877 = vmatprep.subr.mxu0 0.0
        %878 = vmatpush2.msra.mxu0 0.0
        %879 = vmatprep.subr.mxu0 0.0
        %880 = vmatpush2.msra.mxu0 0.0
        %881 = vmatprep.subr.mxu0 0.0
        %882 = vmatpush2.msra.mxu0 0.0
        %883 = vmatprep.subr.mxu0 0.0
        %884 = vmatpush2.msra.mxu0 0.0
        %885 = vmatprep.subr.mxu0 0.0
        %886 = vmatpush2.msra.mxu0 0.0
        %887 = vmatprep.subr.mxu0 0.0
        %888 = vmatpush2.msra.mxu0 0.0
        %889 = vmatprep.mubr.f32.mxu0 0.0
        %890 = vmatmul.mubr.f32.gmra.mxu0 %v823
        %v891 = vpop.f32.mrf.mxu0
        %v892 = vadd.f32 0.0, %v891
        %v893 = vpop.f32.mrf.mxu0
        %894 = vdwg.mxu0
        %v896 = vsel %vm821, %v820, 0
        %898 = vmatprep.subr.mxu0 0.0
        %899 = vmatpush1.msra.mxu0 0.0
        %900 = vmatprep.subr.mxu0 0.0
        %901 = vmatpush1.msra.mxu0 0.0
        %902 = vmatprep.subr.mxu0 0.0
        %903 = vmatpush1.msra.mxu0 0.0
        %904 = vmatprep.subr.mxu0 0.0
        %905 = vmatpush1.msra.mxu0 0.0
        %906 = vmatprep.subr.mxu0 0.0
        %907 = vmatpush1.msra.mxu0 0.0
        %908 = vmatprep.subr.mxu0 0.0
        %909 = vmatpush1.msra.mxu0 0.0
        %910 = vmatprep.subr.mxu0 0.0
        %911 = vmatpush1.msra.mxu0 0.0
        %912 = vmatprep.subr.mxu0 0.0
        %913 = vmatpush1.msra.mxu0 0.0
        %914 = vmatprep.subr.mxu0 0.0
        %915 = vmatpush1.msra.mxu0 0.0
        %916 = vmatprep.subr.mxu0 0.0
        %917 = vmatpush1.msra.mxu0 0.0
        %918 = vmatprep.subr.mxu0 0.0
        %919 = vmatpush1.msra.mxu0 0.0
        %920 = vmatprep.subr.mxu0 0.0
        %921 = vmatpush1.msra.mxu0 0.0
        %922 = vmatprep.subr.mxu0 0.0
        %923 = vmatpush1.msra.mxu0 0.0
        %924 = vmatprep.subr.mxu0 0.0
        %925 = vmatpush1.msra.mxu0 0.0
        %926 = vmatprep.subr.mxu0 0.0
        %927 = vmatpush1.msra.mxu0 %v625
        %928 = vmatprep.subr.mxu0 0.0
        %929 = vmatpush1.msra.mxu0 %v620
        %930 = vmatprep.subr.mxu0 0.0
        %931 = vmatpush2.msra.mxu0 0.0
        %932 = vmatprep.subr.mxu0 0.0
        %933 = vmatpush2.msra.mxu0 0.0
        %934 = vmatprep.subr.mxu0 0.0
        %935 = vmatpush2.msra.mxu0 0.0
        %936 = vmatprep.subr.mxu0 0.0
        %937 = vmatpush2.msra.mxu0 0.0
        %938 = vmatprep.subr.mxu0 0.0
        %939 = vmatpush2.msra.mxu0 0.0
        %940 = vmatprep.subr.mxu0 0.0
        %941 = vmatpush2.msra.mxu0 0.0
        %942 = vmatprep.subr.mxu0 0.0
        %943 = vmatpush2.msra.mxu0 0.0
        %944 = vmatprep.subr.mxu0 0.0
        %945 = vmatpush2.msra.mxu0 0.0
        %946 = vmatprep.subr.mxu0 0.0
        %947 = vmatpush2.msra.mxu0 0.0
        %948 = vmatprep.subr.mxu0 0.0
        %949 = vmatpush2.msra.mxu0 0.0
        %950 = vmatprep.subr.mxu0 0.0
        %951 = vmatpush2.msra.mxu0 0.0
        %952 = vmatprep.subr.mxu0 0.0
        %953 = vmatpush2.msra.mxu0 0.0
        %954 = vmatprep.subr.mxu0 0.0
        %955 = vmatpush2.msra.mxu0 0.0
        %956 = vmatprep.subr.mxu0 0.0
        %957 = vmatpush2.msra.mxu0 0.0
        %958 = vmatprep.subr.mxu0 0.0
        %959 = vmatpush2.msra.mxu0 0.0
        %960 = vmatprep.subr.mxu0 0.0
        %961 = vmatpush2.msra.mxu0 0.0
        %962 = vmatprep.mubr.f32.mxu0 0.0
        %963 = vmatmul.mubr.f32.gmra.mxu0 %v896
        %v964 = vpop.f32.mrf.mxu0
        %v965 = vadd.f32 0.0, %v964
        %v966 = vpop.f32.mrf.mxu0
        %967 = vdwg.mxu0
        %v968 = vadd.f32 %v628, %v892
        %v969 = vadd.f32 %v628, %v965
        %v972 = vcombine.low %v968, %v969
        %974 = vst.msk [vmem:[#allocation2] sm:$0xff] %vm630, %v972
        %975 = vrot.lane.b32.xlu0 %v629, 120
        %v976 = vpop.permute.xlu0 %975
        %977 = vrot.lane.b32.xlu0 %v514, 120
        %v978 = vpop.permute.xlu0 %977
        %979 = vrot.lane.b32.xlu0 %v519, 120
        %v980 = vpop.permute.xlu0 %979
        %v981 = vsel %vm630, %v976, 0
        %v983 = vsel %vm630, %v978, 0
        %v985 = vsel %vm630, %v980, 0
        %987 = vmatprep.subr.mxu0 0.0
        %988 = vmatpush1.xpose.msra.mxu0 0.0
        %989 = vmatprep.subr.mxu0 0.0
        %990 = vmatpush1.xpose.msra.mxu0 0.0
        %991 = vmatprep.subr.mxu0 0.0
        %992 = vmatpush1.xpose.msra.mxu0 0.0
        %993 = vmatprep.subr.mxu0 0.0
        %994 = vmatpush1.xpose.msra.mxu0 0.0
        %995 = vmatprep.subr.mxu0 0.0
        %996 = vmatpush1.xpose.msra.mxu0 0.0
        %997 = vmatprep.subr.mxu0 0.0
        %998 = vmatpush1.xpose.msra.mxu0 0.0
        %999 = vmatprep.subr.mxu0 0.0
        %1000 = vmatpush1.xpose.msra.mxu0 0.0
        %1001 = vmatprep.subr.mxu0 0.0
        %1002 = vmatpush1.xpose.msra.mxu0 0.0
        %1003 = vmatprep.subr.mxu0 0.0
        %1004 = vmatpush1.xpose.msra.mxu0 0.0
        %1005 = vmatprep.subr.mxu0 0.0
        %1006 = vmatpush1.xpose.msra.mxu0 0.0
        %1007 = vmatprep.subr.mxu0 0.0
        %1008 = vmatpush1.xpose.msra.mxu0 0.0
        %1009 = vmatprep.subr.mxu0 0.0
        %1010 = vmatpush1.xpose.msra.mxu0 0.0
        %1011 = vmatprep.subr.mxu0 0.0
        %1012 = vmatpush1.xpose.msra.mxu0 0.0
        %1013 = vmatprep.subr.mxu0 0.0
        %1014 = vmatpush1.xpose.msra.mxu0 0.0
        %1015 = vmatprep.subr.mxu0 0.0
        %1016 = vmatpush1.xpose.msra.mxu0 %v985
        %1017 = vmatprep.subr.mxu0 0.0
        %1018 = vmatpush1.xpose.msra.mxu0 %v983
        %1019 = vmatprep.subr.mxu0 0.0
        %1020 = vmatpush2.xpose.msra.mxu0 0.0
        %1021 = vmatprep.subr.mxu0 0.0
        %1022 = vmatpush2.xpose.msra.mxu0 0.0
        %1023 = vmatprep.subr.mxu0 0.0
        %1024 = vmatpush2.xpose.msra.mxu0 0.0
        %1025 = vmatprep.subr.mxu0 0.0
        %1026 = vmatpush2.xpose.msra.mxu0 0.0
        %1027 = vmatprep.subr.mxu0 0.0
        %1028 = vmatpush2.xpose.msra.mxu0 0.0
        %1029 = vmatprep.subr.mxu0 0.0
        %1030 = vmatpush2.xpose.msra.mxu0 0.0
        %1031 = vmatprep.subr.mxu0 0.0
        %1032 = vmatpush2.xpose.msra.mxu0 0.0
        %1033 = vmatprep.subr.mxu0 0.0
        %1034 = vmatpush2.xpose.msra.mxu0 0.0
        %1035 = vmatprep.subr.mxu0 0.0
        %1036 = vmatpush2.xpose.msra.mxu0 0.0
        %1037 = vmatprep.subr.mxu0 0.0
        %1038 = vmatpush2.xpose.msra.mxu0 0.0
        %1039 = vmatprep.subr.mxu0 0.0
        %1040 = vmatpush2.xpose.msra.mxu0 0.0
        %1041 = vmatprep.subr.mxu0 0.0
        %1042 = vmatpush2.xpose.msra.mxu0 0.0
        %1043 = vmatprep.subr.mxu0 0.0
        %1044 = vmatpush2.xpose.msra.mxu0 0.0
        %1045 = vmatprep.subr.mxu0 0.0
        %1046 = vmatpush2.xpose.msra.mxu0 0.0
        %1047 = vmatprep.subr.mxu0 0.0
        %1048 = vmatpush2.xpose.msra.mxu0 0.0
        %1049 = vmatprep.subr.mxu0 0.0
        %1050 = vmatpush2.xpose.msra.mxu0 0.0
        %1051 = vmatprep.mubr.f32.mxu0 0.0
        %1052 = vmatmul.mubr.f32.gmra.mxu0 %v981
        %v1053 = vpop.f32.mrf.mxu0
        %v1054 = vadd.f32 0.0, %v1053
        %v1055 = vpop.f32.mrf.mxu0
        %1056 = vdwg.mxu0
        %1057 = vrot.lane.b32.xlu0 %v524, 120
        %v1058 = vpop.permute.xlu0 %1057
        %1059 = vrot.lane.b32.xlu0 %v529, 120
        %v1060 = vpop.permute.xlu0 %1059
        %v1061 = vsel %vm630, %v1058, 0
        %v1063 = vsel %vm630, %v1060, 0
        %1065 = vmatprep.subr.mxu0 0.0
        %1066 = vmatpush1.xpose.msra.mxu0 0.0
        %1067 = vmatprep.subr.mxu0 0.0
        %1068 = vmatpush1.xpose.msra.mxu0 0.0
        %1069 = vmatprep.subr.mxu0 0.0
        %1070 = vmatpush1.xpose.msra.mxu0 0.0
        %1071 = vmatprep.subr.mxu0 0.0
        %1072 = vmatpush1.xpose.msra.mxu0 0.0
        %1073 = vmatprep.subr.mxu0 0.0
        %1074 = vmatpush1.xpose.msra.mxu0 0.0
        %1075 = vmatprep.subr.mxu0 0.0
        %1076 = vmatpush1.xpose.msra.mxu0 0.0
        %1077 = vmatprep.subr.mxu0 0.0
        %1078 = vmatpush1.xpose.msra.mxu0 0.0
        %1079 = vmatprep.subr.mxu0 0.0
        %1080 = vmatpush1.xpose.msra.mxu0 0.0
        %1081 = vmatprep.subr.mxu0 0.0
        %1082 = vmatpush1.xpose.msra.mxu0 0.0
        %1083 = vmatprep.subr.mxu0 0.0
        %1084 = vmatpush1.xpose.msra.mxu0 0.0
        %1085 = vmatprep.subr.mxu0 0.0
        %1086 = vmatpush1.xpose.msra.mxu0 0.0
        %1087 = vmatprep.subr.mxu0 0.0
        %1088 = vmatpush1.xpose.msra.mxu0 0.0
        %1089 = vmatprep.subr.mxu0 0.0
        %1090 = vmatpush1.xpose.msra.mxu0 0.0
        %1091 = vmatprep.subr.mxu0 0.0
        %1092 = vmatpush1.xpose.msra.mxu0 0.0
        %1093 = vmatprep.subr.mxu0 0.0
        %1094 = vmatpush1.xpose.msra.mxu0 %v1063
        %1095 = vmatprep.subr.mxu0 0.0
        %1096 = vmatpush1.xpose.msra.mxu0 %v1061
        %1097 = vmatprep.subr.mxu0 0.0
        %1098 = vmatpush2.xpose.msra.mxu0 0.0
        %1099 = vmatprep.subr.mxu0 0.0
        %1100 = vmatpush2.xpose.msra.mxu0 0.0
        %1101 = vmatprep.subr.mxu0 0.0
        %1102 = vmatpush2.xpose.msra.mxu0 0.0
        %1103 = vmatprep.subr.mxu0 0.0
        %1104 = vmatpush2.xpose.msra.mxu0 0.0
        %1105 = vmatprep.subr.mxu0 0.0
        %1106 = vmatpush2.xpose.msra.mxu0 0.0
        %1107 = vmatprep.subr.mxu0 0.0
        %1108 = vmatpush2.xpose.msra.mxu0 0.0
        %1109 = vmatprep.subr.mxu0 0.0
        %1110 = vmatpush2.xpose.msra.mxu0 0.0
        %1111 = vmatprep.subr.mxu0 0.0
        %1112 = vmatpush2.xpose.msra.mxu0 0.0
        %1113 = vmatprep.subr.mxu0 0.0
        %1114 = vmatpush2.xpose.msra.mxu0 0.0
        %1115 = vmatprep.subr.mxu0 0.0
        %1116 = vmatpush2.xpose.msra.mxu0 0.0
        %1117 = vmatprep.subr.mxu0 0.0
        %1118 = vmatpush2.xpose.msra.mxu0 0.0
        %1119 = vmatprep.subr.mxu0 0.0
        %1120 = vmatpush2.xpose.msra.mxu0 0.0
        %1121 = vmatprep.subr.mxu0 0.0
        %1122 = vmatpush2.xpose.msra.mxu0 0.0
        %1123 = vmatprep.subr.mxu0 0.0
        %1124 = vmatpush2.xpose.msra.mxu0 0.0
        %1125 = vmatprep.subr.mxu0 0.0
        %1126 = vmatpush2.xpose.msra.mxu0 0.0
        %1127 = vmatprep.subr.mxu0 0.0
        %1128 = vmatpush2.xpose.msra.mxu0 0.0
        %1129 = vmatprep.mubr.f32.mxu0 0.0
        %1130 = vmatmul.mubr.f32.gmra.mxu0 %v981
        %v1131 = vpop.f32.mrf.mxu0
        %v1132 = vadd.f32 0.0, %v1131
        %v1133 = vpop.f32.mrf.mxu0
        %1134 = vdwg.mxu0
        %v1135 = vsel %vm786, %v1054, -inf
        %1136 = vmax.xlane.f32.xlu0 %v1135
        %v1137 = vpop.xlane.xlu0 %1136
        %v1138 = vsel %vm786, %v1132, -inf
        %1139 = vmax.xlane.f32.xlu0 %v1138
        %v1140 = vpop.xlane.xlu0 %1139
        %v1141 = vsub.f32 %v1054, %v1137
        %v1142 = vsub.f32 %v1132, %v1140
        %v1143 = vmul.f32 %v1141, 1.442695
        %v1144 = vpow.pop %v1143
        %v1145 = vmul.f32 %v1142, 1.442695
        %v1146 = vpow.pop %v1145
        %v1147 = vsel %vm786, %v1144, 0.0
        %1148 = vadd.xlane.f32.xlu0 %v1147
        %v1149 = vpop.xlane.xlu0 %1148
        %v1150 = vsel %vm786, %v1146, 0.0
        %1151 = vadd.xlane.f32.xlu0 %v1150
        %v1152 = vpop.xlane.xlu0 %1151
        %v1153 = vrcp.pop %v1149
        %v1154 = vrcp.pop %v1152
        %v1155 = vmul.f32 %v1149, %v1153
        %v1156 = vmul.f32 %v1152, %v1154
        %v1157 = vsub.f32 2.0, %v1155
        %v1158 = vsub.f32 2.0, %v1156
        %v1159 = vmul.f32 %v1153, %v1157
        %v1160 = vmul.f32 %v1154, %v1158
        %v1161 = vmul.f32 %v1149, %v1159
        %v1162 = vmul.f32 %v1152, %v1160
        %v1163 = vsub.f32 2.0, %v1161
        %v1164 = vsub.f32 2.0, %v1162
        %v1165 = vmul.f32 %v1159, %v1163
        %v1166 = vmul.f32 %v1160, %v1164
        %v1167 = vmul.f32 %v1144, %v1165
        %v1168 = vmul.f32 %v1146, %v1166
        %1171 = vrot.lane.b32.xlu0 %v610, 120
        %v1172 = vpop.permute.xlu0 %1171
        %1173 = vrot.lane.b32.xlu0 %v615, 120
        %v1174 = vpop.permute.xlu0 %1173
        %v1178 = vsel %vm821, %v1167, 0
        %1180 = vmatprep.subr.mxu0 0.0
        %1181 = vmatpush1.msra.mxu0 0.0
        %1182 = vmatprep.subr.mxu0 0.0
        %1183 = vmatpush1.msra.mxu0 0.0
        %1184 = vmatprep.subr.mxu0 0.0
        %1185 = vmatpush1.msra.mxu0 0.0
        %1186 = vmatprep.subr.mxu0 0.0
        %1187 = vmatpush1.msra.mxu0 0.0
        %1188 = vmatprep.subr.mxu0 0.0
        %1189 = vmatpush1.msra.mxu0 0.0
        %1190 = vmatprep.subr.mxu0 0.0
        %1191 = vmatpush1.msra.mxu0 0.0
        %1192 = vmatprep.subr.mxu0 0.0
        %1193 = vmatpush1.msra.mxu0 0.0
        %1194 = vmatprep.subr.mxu0 0.0
        %1195 = vmatpush1.msra.mxu0 0.0
        %1196 = vmatprep.subr.mxu0 0.0
        %1197 = vmatpush1.msra.mxu0 0.0
        %1198 = vmatprep.subr.mxu0 0.0
        %1199 = vmatpush1.msra.mxu0 0.0
        %1200 = vmatprep.subr.mxu0 0.0
        %1201 = vmatpush1.msra.mxu0 0.0
        %1202 = vmatprep.subr.mxu0 0.0
        %1203 = vmatpush1.msra.mxu0 0.0
        %1204 = vmatprep.subr.mxu0 0.0
        %1205 = vmatpush1.msra.mxu0 0.0
        %1206 = vmatprep.subr.mxu0 0.0
        %1207 = vmatpush1.msra.mxu0 0.0
        %1208 = vmatprep.subr.mxu0 0.0
        %1209 = vmatpush1.msra.mxu0 %v1174
        %1210 = vmatprep.subr.mxu0 0.0
        %1211 = vmatpush1.msra.mxu0 %v1172
        %1212 = vmatprep.subr.mxu0 0.0
        %1213 = vmatpush2.msra.mxu0 0.0
        %1214 = vmatprep.subr.mxu0 0.0
        %1215 = vmatpush2.msra.mxu0 0.0
        %1216 = vmatprep.subr.mxu0 0.0
        %1217 = vmatpush2.msra.mxu0 0.0
        %1218 = vmatprep.subr.mxu0 0.0
        %1219 = vmatpush2.msra.mxu0 0.0
        %1220 = vmatprep.subr.mxu0 0.0
        %1221 = vmatpush2.msra.mxu0 0.0
        %1222 = vmatprep.subr.mxu0 0.0
        %1223 = vmatpush2.msra.mxu0 0.0
        %1224 = vmatprep.subr.mxu0 0.0
        %1225 = vmatpush2.msra.mxu0 0.0
        %1226 = vmatprep.subr.mxu0 0.0
        %1227 = vmatpush2.msra.mxu0 0.0
        %1228 = vmatprep.subr.mxu0 0.0
        %1229 = vmatpush2.msra.mxu0 0.0
        %1230 = vmatprep.subr.mxu0 0.0
        %1231 = vmatpush2.msra.mxu0 0.0
        %1232 = vmatprep.subr.mxu0 0.0
        %1233 = vmatpush2.msra.mxu0 0.0
        %1234 = vmatprep.subr.mxu0 0.0
        %1235 = vmatpush2.msra.mxu0 0.0
        %1236 = vmatprep.subr.mxu0 0.0
        %1237 = vmatpush2.msra.mxu0 0.0
        %1238 = vmatprep.subr.mxu0 0.0
        %1239 = vmatpush2.msra.mxu0 0.0
        %1240 = vmatprep.subr.mxu0 0.0
        %1241 = vmatpush2.msra.mxu0 0.0
        %1242 = vmatprep.subr.mxu0 0.0
        %1243 = vmatpush2.msra.mxu0 0.0
        %1244 = vmatprep.mubr.f32.mxu0 0.0
        %1245 = vmatmul.mubr.f32.gmra.mxu0 %v1178
        %v1246 = vpop.f32.mrf.mxu0
        %v1247 = vadd.f32 0.0, %v1246
        %v1248 = vpop.f32.mrf.mxu0
        %1249 = vdwg.mxu0
        %1252 = vrot.lane.b32.xlu0 %v620, 120
        %v1253 = vpop.permute.xlu0 %1252
        %1254 = vrot.lane.b32.xlu0 %v625, 120
        %v1255 = vpop.permute.xlu0 %1254
        %v1259 = vsel %vm821, %v1168, 0
        %1261 = vmatprep.subr.mxu0 0.0
        %1262 = vmatpush1.msra.mxu0 0.0
        %1263 = vmatprep.subr.mxu0 0.0
        %1264 = vmatpush1.msra.mxu0 0.0
        %1265 = vmatprep.subr.mxu0 0.0
        %1266 = vmatpush1.msra.mxu0 0.0
        %1267 = vmatprep.subr.mxu0 0.0
        %1268 = vmatpush1.msra.mxu0 0.0
        %1269 = vmatprep.subr.mxu0 0.0
        %1270 = vmatpush1.msra.mxu0 0.0
        %1271 = vmatprep.subr.mxu0 0.0
        %1272 = vmatpush1.msra.mxu0 0.0
        %1273 = vmatprep.subr.mxu0 0.0
        %1274 = vmatpush1.msra.mxu0 0.0
        %1275 = vmatprep.subr.mxu0 0.0
        %1276 = vmatpush1.msra.mxu0 0.0
        %1277 = vmatprep.subr.mxu0 0.0
        %1278 = vmatpush1.msra.mxu0 0.0
        %1279 = vmatprep.subr.mxu0 0.0
        %1280 = vmatpush1.msra.mxu0 0.0
        %1281 = vmatprep.subr.mxu0 0.0
        %1282 = vmatpush1.msra.mxu0 0.0
        %1283 = vmatprep.subr.mxu0 0.0
        %1284 = vmatpush1.msra.mxu0 0.0
        %1285 = vmatprep.subr.mxu0 0.0
        %1286 = vmatpush1.msra.mxu0 0.0
        %1287 = vmatprep.subr.mxu0 0.0
        %1288 = vmatpush1.msra.mxu0 0.0
        %1289 = vmatprep.subr.mxu0 0.0
        %1290 = vmatpush1.msra.mxu0 %v1255
        %1291 = vmatprep.subr.mxu0 0.0
        %1292 = vmatpush1.msra.mxu0 %v1253
        %1293 = vmatprep.subr.mxu0 0.0
        %1294 = vmatpush2.msra.mxu0 0.0
        %1295 = vmatprep.subr.mxu0 0.0
        %1296 = vmatpush2.msra.mxu0 0.0
        %1297 = vmatprep.subr.mxu0 0.0
        %1298 = vmatpush2.msra.mxu0 0.0
        %1299 = vmatprep.subr.mxu0 0.0
        %1300 = vmatpush2.msra.mxu0 0.0
        %1301 = vmatprep.subr.mxu0 0.0
        %1302 = vmatpush2.msra.mxu0 0.0
        %1303 = vmatprep.subr.mxu0 0.0
        %1304 = vmatpush2.msra.mxu0 0.0
        %1305 = vmatprep.subr.mxu0 0.0
        %1306 = vmatpush2.msra.mxu0 0.0
        %1307 = vmatprep.subr.mxu0 0.0
        %1308 = vmatpush2.msra.mxu0 0.0
        %1309 = vmatprep.subr.mxu0 0.0
        %1310 = vmatpush2.msra.mxu0 0.0
        %1311 = vmatprep.subr.mxu0 0.0
        %1312 = vmatpush2.msra.mxu0 0.0
        %1313 = vmatprep.subr.mxu0 0.0
        %1314 = vmatpush2.msra.mxu0 0.0
        %1315 = vmatprep.subr.mxu0 0.0
        %1316 = vmatpush2.msra.mxu0 0.0
        %1317 = vmatprep.subr.mxu0 0.0
        %1318 = vmatpush2.msra.mxu0 0.0
        %1319 = vmatprep.subr.mxu0 0.0
        %1320 = vmatpush2.msra.mxu0 0.0
        %1321 = vmatprep.subr.mxu0 0.0
        %1322 = vmatpush2.msra.mxu0 0.0
        %1323 = vmatprep.subr.mxu0 0.0
        %1324 = vmatpush2.msra.mxu0 0.0
        %1325 = vmatprep.mubr.f32.mxu0 0.0
        %1326 = vmatmul.mubr.f32.gmra.mxu0 %v1259
        %v1327 = vpop.f32.mrf.mxu0
        %v1328 = vadd.f32 0.0, %v1327
        %v1329 = vpop.f32.mrf.mxu0
        %1330 = vdwg.mxu0
        %1333 = vrot.lane.b32.xlu0 %v1247, 8
        %v1334 = vpop.permute.xlu0 %1333
        %1335 = vrot.lane.b32.xlu0 %v1328, 8
        %v1336 = vpop.permute.xlu0 %1335
        %v1339 = vadd.f32 %v628, %v1334
        %v1340 = vadd.f32 %v628, %v1336
        %v1343 = vcombine.low %v1339, %v1340
        %vm1345 = vcmask 130112
        %1346 = vst.msk [vmem:[#allocation2] sm:$0xff] %vm1345, %v1343
        %1347 = vrot.lane.b32.xlu0 %v629, 112
        %v1348 = vpop.permute.xlu0 %1347
        %1349 = vrot.lane.b32.xlu0 %v514, 112
        %v1350 = vpop.permute.xlu0 %1349
        %1351 = vrot.lane.b32.xlu0 %v519, 112
        %v1352 = vpop.permute.xlu0 %1351
        %v1353 = vsel %vm630, %v1348, 0
        %v1355 = vsel %vm630, %v1350, 0
        %v1357 = vsel %vm630, %v1352, 0
        %1359 = vmatprep.subr.mxu0 0.0
        %1360 = vmatpush1.xpose.msra.mxu0 0.0
        %1361 = vmatprep.subr.mxu0 0.0
        %1362 = vmatpush1.xpose.msra.mxu0 0.0
        %1363 = vmatprep.subr.mxu0 0.0
        %1364 = vmatpush1.xpose.msra.mxu0 0.0
        %1365 = vmatprep.subr.mxu0 0.0
        %1366 = vmatpush1.xpose.msra.mxu0 0.0
        %1367 = vmatprep.subr.mxu0 0.0
        %1368 = vmatpush1.xpose.msra.mxu0 0.0
        %1369 = vmatprep.subr.mxu0 0.0
        %1370 = vmatpush1.xpose.msra.mxu0 0.0
        %1371 = vmatprep.subr.mxu0 0.0
        %1372 = vmatpush1.xpose.msra.mxu0 0.0
        %1373 = vmatprep.subr.mxu0 0.0
        %1374 = vmatpush1.xpose.msra.mxu0 0.0
        %1375 = vmatprep.subr.mxu0 0.0
        %1376 = vmatpush1.xpose.msra.mxu0 0.0
        %1377 = vmatprep.subr.mxu0 0.0
        %1378 = vmatpush1.xpose.msra.mxu0 0.0
        %1379 = vmatprep.subr.mxu0 0.0
        %1380 = vmatpush1.xpose.msra.mxu0 0.0
        %1381 = vmatprep.subr.mxu0 0.0
        %1382 = vmatpush1.xpose.msra.mxu0 0.0
        %1383 = vmatprep.subr.mxu0 0.0
        %1384 = vmatpush1.xpose.msra.mxu0 0.0
        %1385 = vmatprep.subr.mxu0 0.0
        %1386 = vmatpush1.xpose.msra.mxu0 0.0
        %1387 = vmatprep.subr.mxu0 0.0
        %1388 = vmatpush1.xpose.msra.mxu0 %v1357
        %1389 = vmatprep.subr.mxu0 0.0
        %1390 = vmatpush1.xpose.msra.mxu0 %v1355
        %1391 = vmatprep.subr.mxu0 0.0
        %1392 = vmatpush2.xpose.msra.mxu0 0.0
        %1393 = vmatprep.subr.mxu0 0.0
        %1394 = vmatpush2.xpose.msra.mxu0 0.0
        %1395 = vmatprep.subr.mxu0 0.0
        %1396 = vmatpush2.xpose.msra.mxu0 0.0
        %1397 = vmatprep.subr.mxu0 0.0
        %1398 = vmatpush2.xpose.msra.mxu0 0.0
        %1399 = vmatprep.subr.mxu0 0.0
        %1400 = vmatpush2.xpose.msra.mxu0 0.0
        %1401 = vmatprep.subr.mxu0 0.0
        %1402 = vmatpush2.xpose.msra.mxu0 0.0
        %1403 = vmatprep.subr.mxu0 0.0
        %1404 = vmatpush2.xpose.msra.mxu0 0.0
        %1405 = vmatprep.subr.mxu0 0.0
        %1406 = vmatpush2.xpose.msra.mxu0 0.0
        %1407 = vmatprep.subr.mxu0 0.0
        %1408 = vmatpush2.xpose.msra.mxu0 0.0
        %1409 = vmatprep.subr.mxu0 0.0
        %1410 = vmatpush2.xpose.msra.mxu0 0.0
        %1411 = vmatprep.subr.mxu0 0.0
        %1412 = vmatpush2.xpose.msra.mxu0 0.0
        %1413 = vmatprep.subr.mxu0 0.0
        %1414 = vmatpush2.xpose.msra.mxu0 0.0
        %1415 = vmatprep.subr.mxu0 0.0
        %1416 = vmatpush2.xpose.msra.mxu0 0.0
        %1417 = vmatprep.subr.mxu0 0.0
        %1418 = vmatpush2.xpose.msra.mxu0 0.0
        %1419 = vmatprep.subr.mxu0 0.0
        %1420 = vmatpush2.xpose.msra.mxu0 0.0
        %1421 = vmatprep.subr.mxu0 0.0
        %1422 = vmatpush2.xpose.msra.mxu0 0.0
        %1423 = vmatprep.mubr.f32.mxu0 0.0
        %1424 = vmatmul.mubr.f32.gmra.mxu0 %v1353
        %v1425 = vpop.f32.mrf.mxu0
        %v1426 = vadd.f32 0.0, %v1425
        %v1427 = vpop.f32.mrf.mxu0
        %1428 = vdwg.mxu0
        %1429 = vrot.lane.b32.xlu0 %v524, 112
        %v1430 = vpop.permute.xlu0 %1429
        %1431 = vrot.lane.b32.xlu0 %v529, 112
        %v1432 = vpop.permute.xlu0 %1431
        %v1433 = vsel %vm630, %v1430, 0
        %v1435 = vsel %vm630, %v1432, 0
        %1437 = vmatprep.subr.mxu0 0.0
        %1438 = vmatpush1.xpose.msra.mxu0 0.0
        %1439 = vmatprep.subr.mxu0 0.0
        %1440 = vmatpush1.xpose.msra.mxu0 0.0
        %1441 = vmatprep.subr.mxu0 0.0
        %1442 = vmatpush1.xpose.msra.mxu0 0.0
        %1443 = vmatprep.subr.mxu0 0.0
        %1444 = vmatpush1.xpose.msra.mxu0 0.0
        %1445 = vmatprep.subr.mxu0 0.0
        %1446 = vmatpush1.xpose.msra.mxu0 0.0
        %1447 = vmatprep.subr.mxu0 0.0
        %1448 = vmatpush1.xpose.msra.mxu0 0.0
        %1449 = vmatprep.subr.mxu0 0.0
        %1450 = vmatpush1.xpose.msra.mxu0 0.0
        %1451 = vmatprep.subr.mxu0 0.0
        %1452 = vmatpush1.xpose.msra.mxu0 0.0
        %1453 = vmatprep.subr.mxu0 0.0
        %1454 = vmatpush1.xpose.msra.mxu0 0.0
        %1455 = vmatprep.subr.mxu0 0.0
        %1456 = vmatpush1.xpose.msra.mxu0 0.0
        %1457 = vmatprep.subr.mxu0 0.0
        %1458 = vmatpush1.xpose.msra.mxu0 0.0
        %1459 = vmatprep.subr.mxu0 0.0
        %1460 = vmatpush1.xpose.msra.mxu0 0.0
        %1461 = vmatprep.subr.mxu0 0.0
        %1462 = vmatpush1.xpose.msra.mxu0 0.0
        %1463 = vmatprep.subr.mxu0 0.0
        %1464 = vmatpush1.xpose.msra.mxu0 0.0
        %1465 = vmatprep.subr.mxu0 0.0
        %1466 = vmatpush1.xpose.msra.mxu0 %v1435
        %1467 = vmatprep.subr.mxu0 0.0
        %1468 = vmatpush1.xpose.msra.mxu0 %v1433
        %1469 = vmatprep.subr.mxu0 0.0
        %1470 = vmatpush2.xpose.msra.mxu0 0.0
        %1471 = vmatprep.subr.mxu0 0.0
        %1472 = vmatpush2.xpose.msra.mxu0 0.0
        %1473 = vmatprep.subr.mxu0 0.0
        %1474 = vmatpush2.xpose.msra.mxu0 0.0
        %1475 = vmatprep.subr.mxu0 0.0
        %1476 = vmatpush2.xpose.msra.mxu0 0.0
        %1477 = vmatprep.subr.mxu0 0.0
        %1478 = vmatpush2.xpose.msra.mxu0 0.0
        %1479 = vmatprep.subr.mxu0 0.0
        %1480 = vmatpush2.xpose.msra.mxu0 0.0
        %1481 = vmatprep.subr.mxu0 0.0
        %1482 = vmatpush2.xpose.msra.mxu0 0.0
        %1483 = vmatprep.subr.mxu0 0.0
        %1484 = vmatpush2.xpose.msra.mxu0 0.0
        %1485 = vmatprep.subr.mxu0 0.0
        %1486 = vmatpush2.xpose.msra.mxu0 0.0
        %1487 = vmatprep.subr.mxu0 0.0
        %1488 = vmatpush2.xpose.msra.mxu0 0.0
        %1489 = vmatprep.subr.mxu0 0.0
        %1490 = vmatpush2.xpose.msra.mxu0 0.0
        %1491 = vmatprep.subr.mxu0 0.0
        %1492 = vmatpush2.xpose.msra.mxu0 0.0
        %1493 = vmatprep.subr.mxu0 0.0
        %1494 = vmatpush2.xpose.msra.mxu0 0.0
        %1495 = vmatprep.subr.mxu0 0.0
        %1496 = vmatpush2.xpose.msra.mxu0 0.0
        %1497 = vmatprep.subr.mxu0 0.0
        %1498 = vmatpush2.xpose.msra.mxu0 0.0
        %1499 = vmatprep.subr.mxu0 0.0
        %1500 = vmatpush2.xpose.msra.mxu0 0.0
        %1501 = vmatprep.mubr.f32.mxu0 0.0
        %1502 = vmatmul.mubr.f32.gmra.mxu0 %v1353
        %v1503 = vpop.f32.mrf.mxu0
        %v1504 = vadd.f32 0.0, %v1503
        %v1505 = vpop.f32.mrf.mxu0
        %1506 = vdwg.mxu0
        %v1507 = vsel %vm786, %v1426, -inf
        %1508 = vmax.xlane.f32.xlu0 %v1507
        %v1509 = vpop.xlane.xlu0 %1508
        %v1510 = vsel %vm786, %v1504, -inf
        %1511 = vmax.xlane.f32.xlu0 %v1510
        %v1512 = vpop.xlane.xlu0 %1511
        %v1513 = vsub.f32 %v1426, %v1509
        %v1514 = vsub.f32 %v1504, %v1512
        %v1515 = vmul.f32 %v1513, 1.442695
        %v1516 = vpow.pop %v1515
        %v1517 = vmul.f32 %v1514, 1.442695
        %v1518 = vpow.pop %v1517
        %v1519 = vsel %vm786, %v1516, 0.0
        %1520 = vadd.xlane.f32.xlu0 %v1519
        %v1521 = vpop.xlane.xlu0 %1520
        %v1522 = vsel %vm786, %v1518, 0.0
        %1523 = vadd.xlane.f32.xlu0 %v1522
        %v1524 = vpop.xlane.xlu0 %1523
        %v1525 = vrcp.pop %v1521
        %v1526 = vrcp.pop %v1524
        %v1527 = vmul.f32 %v1521, %v1525
        %v1528 = vmul.f32 %v1524, %v1526
        %v1529 = vsub.f32 2.0, %v1527
        %v1530 = vsub.f32 2.0, %v1528
        %v1531 = vmul.f32 %v1525, %v1529
        %v1532 = vmul.f32 %v1526, %v1530
        %v1533 = vmul.f32 %v1521, %v1531
        %v1534 = vmul.f32 %v1524, %v1532
        %v1535 = vsub.f32 2.0, %v1533
        %v1536 = vsub.f32 2.0, %v1534
        %v1537 = vmul.f32 %v1531, %v1535
        %v1538 = vmul.f32 %v1532, %v1536
        %v1539 = vmul.f32 %v1516, %v1537
        %v1540 = vmul.f32 %v1518, %v1538
        %1541 = vrot.lane.b32.xlu0 %v610, 112
        %v1542 = vpop.permute.xlu0 %1541
        %1543 = vrot.lane.b32.xlu0 %v615, 112
        %v1544 = vpop.permute.xlu0 %1543
        %v1548 = vsel %vm821, %v1539, 0
        %1550 = vmatprep.subr.mxu0 0.0
        %1551 = vmatpush1.msra.mxu0 0.0
        %1552 = vmatprep.subr.mxu0 0.0
        %1553 = vmatpush1.msra.mxu0 0.0
        %1554 = vmatprep.subr.mxu0 0.0
        %1555 = vmatpush1.msra.mxu0 0.0
        %1556 = vmatprep.subr.mxu0 0.0
        %1557 = vmatpush1.msra.mxu0 0.0
        %1558 = vmatprep.subr.mxu0 0.0
        %1559 = vmatpush1.msra.mxu0 0.0
        %1560 = vmatprep.subr.mxu0 0.0
        %1561 = vmatpush1.msra.mxu0 0.0
        %1562 = vmatprep.subr.mxu0 0.0
        %1563 = vmatpush1.msra.mxu0 0.0
        %1564 = vmatprep.subr.mxu0 0.0
        %1565 = vmatpush1.msra.mxu0 0.0
        %1566 = vmatprep.subr.mxu0 0.0
        %1567 = vmatpush1.msra.mxu0 0.0
        %1568 = vmatprep.subr.mxu0 0.0
        %1569 = vmatpush1.msra.mxu0 0.0
        %1570 = vmatprep.subr.mxu0 0.0
        %1571 = vmatpush1.msra.mxu0 0.0
        %1572 = vmatprep.subr.mxu0 0.0
        %1573 = vmatpush1.msra.mxu0 0.0
        %1574 = vmatprep.subr.mxu0 0.0
        %1575 = vmatpush1.msra.mxu0 0.0
        %1576 = vmatprep.subr.mxu0 0.0
        %1577 = vmatpush1.msra.mxu0 0.0
        %1578 = vmatprep.subr.mxu0 0.0
        %1579 = vmatpush1.msra.mxu0 %v1544
        %1580 = vmatprep.subr.mxu0 0.0
        %1581 = vmatpush1.msra.mxu0 %v1542
        %1582 = vmatprep.subr.mxu0 0.0
        %1583 = vmatpush2.msra.mxu0 0.0
        %1584 = vmatprep.subr.mxu0 0.0
        %1585 = vmatpush2.msra.mxu0 0.0
        %1586 = vmatprep.subr.mxu0 0.0
        %1587 = vmatpush2.msra.mxu0 0.0
        %1588 = vmatprep.subr.mxu0 0.0
        %1589 = vmatpush2.msra.mxu0 0.0
        %1590 = vmatprep.subr.mxu0 0.0
        %1591 = vmatpush2.msra.mxu0 0.0
        %1592 = vmatprep.subr.mxu0 0.0
        %1593 = vmatpush2.msra.mxu0 0.0
        %1594 = vmatprep.subr.mxu0 0.0
        %1595 = vmatpush2.msra.mxu0 0.0
        %1596 = vmatprep.subr.mxu0 0.0
        %1597 = vmatpush2.msra.mxu0 0.0
        %1598 = vmatprep.subr.mxu0 0.0
        %1599 = vmatpush2.msra.mxu0 0.0
        %1600 = vmatprep.subr.mxu0 0.0
        %1601 = vmatpush2.msra.mxu0 0.0
        %1602 = vmatprep.subr.mxu0 0.0
        %1603 = vmatpush2.msra.mxu0 0.0
        %1604 = vmatprep.subr.mxu0 0.0
        %1605 = vmatpush2.msra.mxu0 0.0
        %1606 = vmatprep.subr.mxu0 0.0
        %1607 = vmatpush2.msra.mxu0 0.0
        %1608 = vmatprep.subr.mxu0 0.0
        %1609 = vmatpush2.msra.mxu0 0.0
        %1610 = vmatprep.subr.mxu0 0.0
        %1611 = vmatpush2.msra.mxu0 0.0
        %1612 = vmatprep.subr.mxu0 0.0
        %1613 = vmatpush2.msra.mxu0 0.0
        %1614 = vmatprep.mubr.f32.mxu0 0.0
        %1615 = vmatmul.mubr.f32.gmra.mxu0 %v1548
        %v1616 = vpop.f32.mrf.mxu0
        %v1617 = vadd.f32 0.0, %v1616
        %v1618 = vpop.f32.mrf.mxu0
        %1619 = vdwg.mxu0
        %1620 = vrot.lane.b32.xlu0 %v620, 112
        %v1621 = vpop.permute.xlu0 %1620
        %1622 = vrot.lane.b32.xlu0 %v625, 112
        %v1623 = vpop.permute.xlu0 %1622
        %v1627 = vsel %vm821, %v1540, 0
        %1629 = vmatprep.subr.mxu0 0.0
        %1630 = vmatpush1.msra.mxu0 0.0
        %1631 = vmatprep.subr.mxu0 0.0
        %1632 = vmatpush1.msra.mxu0 0.0
        %1633 = vmatprep.subr.mxu0 0.0
        %1634 = vmatpush1.msra.mxu0 0.0
        %1635 = vmatprep.subr.mxu0 0.0
        %1636 = vmatpush1.msra.mxu0 0.0
        %1637 = vmatprep.subr.mxu0 0.0
        %1638 = vmatpush1.msra.mxu0 0.0
        %1639 = vmatprep.subr.mxu0 0.0
        %1640 = vmatpush1.msra.mxu0 0.0
        %1641 = vmatprep.subr.mxu0 0.0
        %1642 = vmatpush1.msra.mxu0 0.0
        %1643 = vmatprep.subr.mxu0 0.0
        %1644 = vmatpush1.msra.mxu0 0.0
        %1645 = vmatprep.subr.mxu0 0.0
        %1646 = vmatpush1.msra.mxu0 0.0
        %1647 = vmatprep.subr.mxu0 0.0
        %1648 = vmatpush1.msra.mxu0 0.0
        %1649 = vmatprep.subr.mxu0 0.0
        %1650 = vmatpush1.msra.mxu0 0.0
        %1651 = vmatprep.subr.mxu0 0.0
        %1652 = vmatpush1.msra.mxu0 0.0
        %1653 = vmatprep.subr.mxu0 0.0
        %1654 = vmatpush1.msra.mxu0 0.0
        %1655 = vmatprep.subr.mxu0 0.0
        %1656 = vmatpush1.msra.mxu0 0.0
        %1657 = vmatprep.subr.mxu0 0.0
        %1658 = vmatpush1.msra.mxu0 %v1623
        %1659 = vmatprep.subr.mxu0 0.0
        %1660 = vmatpush1.msra.mxu0 %v1621
        %1661 = vmatprep.subr.mxu0 0.0
        %1662 = vmatpush2.msra.mxu0 0.0
        %1663 = vmatprep.subr.mxu0 0.0
        %1664 = vmatpush2.msra.mxu0 0.0
        %1665 = vmatprep.subr.mxu0 0.0
        %1666 = vmatpush2.msra.mxu0 0.0
        %1667 = vmatprep.subr.mxu0 0.0
        %1668 = vmatpush2.msra.mxu0 0.0
        %1669 = vmatprep.subr.mxu0 0.0
        %1670 = vmatpush2.msra.mxu0 0.0
        %1671 = vmatprep.subr.mxu0 0.0
        %1672 = vmatpush2.msra.mxu0 0.0
        %1673 = vmatprep.subr.mxu0 0.0
        %1674 = vmatpush2.msra.mxu0 0.0
        %1675 = vmatprep.subr.mxu0 0.0
        %1676 = vmatpush2.msra.mxu0 0.0
        %1677 = vmatprep.subr.mxu0 0.0
        %1678 = vmatpush2.msra.mxu0 0.0
        %1679 = vmatprep.subr.mxu0 0.0
        %1680 = vmatpush2.msra.mxu0 0.0
        %1681 = vmatprep.subr.mxu0 0.0
        %1682 = vmatpush2.msra.mxu0 0.0
        %1683 = vmatprep.subr.mxu0 0.0
        %1684 = vmatpush2.msra.mxu0 0.0
        %1685 = vmatprep.subr.mxu0 0.0
        %1686 = vmatpush2.msra.mxu0 0.0
        %1687 = vmatprep.subr.mxu0 0.0
        %1688 = vmatpush2.msra.mxu0 0.0
        %1689 = vmatprep.subr.mxu0 0.0
        %1690 = vmatpush2.msra.mxu0 0.0
        %1691 = vmatprep.subr.mxu0 0.0
        %1692 = vmatpush2.msra.mxu0 0.0
        %1693 = vmatprep.mubr.f32.mxu0 0.0
        %1694 = vmatmul.mubr.f32.gmra.mxu0 %v1627
        %v1695 = vpop.f32.mrf.mxu0
        %v1696 = vadd.f32 0.0, %v1695
        %v1697 = vpop.f32.mrf.mxu0
        %1698 = vdwg.mxu0
        %1701 = vrot.lane.b32.xlu0 %v1617, 16
        %v1702 = vpop.permute.xlu0 %1701
        %1703 = vrot.lane.b32.xlu0 %v1696, 16
        %v1704 = vpop.permute.xlu0 %1703
        %v1707 = vadd.f32 %v628, %v1702
        %v1708 = vadd.f32 %v628, %v1704
        %v1711 = vcombine.low %v1707, %v1708
        %vm1713 = vcmask 195712
        %1714 = vst.msk [vmem:[#allocation2] sm:$0xff] %vm1713, %v1711
        %1715 = vrot.lane.b32.xlu0 %v629, 104
        %v1716 = vpop.permute.xlu0 %1715
        %1717 = vrot.lane.b32.xlu0 %v514, 104
        %v1718 = vpop.permute.xlu0 %1717
        %1719 = vrot.lane.b32.xlu0 %v519, 104
        %v1720 = vpop.permute.xlu0 %1719
        %v1721 = vsel %vm630, %v1716, 0
        %v1723 = vsel %vm630, %v1718, 0
        %v1725 = vsel %vm630, %v1720, 0
        %1727 = vmatprep.subr.mxu0 0.0
        %1728 = vmatpush1.xpose.msra.mxu0 0.0
        %1729 = vmatprep.subr.mxu0 0.0
        %1730 = vmatpush1.xpose.msra.mxu0 0.0
        %1731 = vmatprep.subr.mxu0 0.0
        %1732 = vmatpush1.xpose.msra.mxu0 0.0
        %1733 = vmatprep.subr.mxu0 0.0
        %1734 = vmatpush1.xpose.msra.mxu0 0.0
        %1735 = vmatprep.subr.mxu0 0.0
        %1736 = vmatpush1.xpose.msra.mxu0 0.0
        %1737 = vmatprep.subr.mxu0 0.0
        %1738 = vmatpush1.xpose.msra.mxu0 0.0
        %1739 = vmatprep.subr.mxu0 0.0
        %1740 = vmatpush1.xpose.msra.mxu0 0.0
        %1741 = vmatprep.subr.mxu0 0.0
        %1742 = vmatpush1.xpose.msra.mxu0 0.0
        %1743 = vmatprep.subr.mxu0 0.0
        %1744 = vmatpush1.xpose.msra.mxu0 0.0
        %1745 = vmatprep.subr.mxu0 0.0
        %1746 = vmatpush1.xpose.msra.mxu0 0.0
        %1747 = vmatprep.subr.mxu0 0.0
        %1748 = vmatpush1.xpose.msra.mxu0 0.0
        %1749 = vmatprep.subr.mxu0 0.0
        %1750 = vmatpush1.xpose.msra.mxu0 0.0
        %1751 = vmatprep.subr.mxu0 0.0
        %1752 = vmatpush1.xpose.msra.mxu0 0.0
        %1753 = vmatprep.subr.mxu0 0.0
        %1754 = vmatpush1.xpose.msra.mxu0 0.0
        %1755 = vmatprep.subr.mxu0 0.0
        %1756 = vmatpush1.xpose.msra.mxu0 %v1725
        %1757 = vmatprep.subr.mxu0 0.0
        %1758 = vmatpush1.xpose.msra.mxu0 %v1723
        %1759 = vmatprep.subr.mxu0 0.0
        %1760 = vmatpush2.xpose.msra.mxu0 0.0
        %1761 = vmatprep.subr.mxu0 0.0
        %1762 = vmatpush2.xpose.msra.mxu0 0.0
        %1763 = vmatprep.subr.mxu0 0.0
        %1764 = vmatpush2.xpose.msra.mxu0 0.0
        %1765 = vmatprep.subr.mxu0 0.0
        %1766 = vmatpush2.xpose.msra.mxu0 0.0
        %1767 = vmatprep.subr.mxu0 0.0
        %1768 = vmatpush2.xpose.msra.mxu0 0.0
        %1769 = vmatprep.subr.mxu0 0.0
        %1770 = vmatpush2.xpose.msra.mxu0 0.0
        %1771 = vmatprep.subr.mxu0 0.0
        %1772 = vmatpush2.xpose.msra.mxu0 0.0
        %1773 = vmatprep.subr.mxu0 0.0
        %1774 = vmatpush2.xpose.msra.mxu0 0.0
        %1775 = vmatprep.subr.mxu0 0.0
        %1776 = vmatpush2.xpose.msra.mxu0 0.0
        %1777 = vmatprep.subr.mxu0 0.0
        %1778 = vmatpush2.xpose.msra.mxu0 0.0
        %1779 = vmatprep.subr.mxu0 0.0
        %1780 = vmatpush2.xpose.msra.mxu0 0.0
        %1781 = vmatprep.subr.mxu0 0.0
        %1782 = vmatpush2.xpose.msra.mxu0 0.0
        %1783 = vmatprep.subr.mxu0 0.0
        %1784 = vmatpush2.xpose.msra.mxu0 0.0
        %1785 = vmatprep.subr.mxu0 0.0
        %1786 = vmatpush2.xpose.msra.mxu0 0.0
        %1787 = vmatprep.subr.mxu0 0.0
        %1788 = vmatpush2.xpose.msra.mxu0 0.0
        %1789 = vmatprep.subr.mxu0 0.0
        %1790 = vmatpush2.xpose.msra.mxu0 0.0
        %1791 = vmatprep.mubr.f32.mxu0 0.0
        %1792 = vmatmul.mubr.f32.gmra.mxu0 %v1721
        %v1793 = vpop.f32.mrf.mxu0
        %v1794 = vadd.f32 0.0, %v1793
        %v1795 = vpop.f32.mrf.mxu0
        %1796 = vdwg.mxu0
        %1797 = vrot.lane.b32.xlu0 %v524, 104
        %v1798 = vpop.permute.xlu0 %1797
        %1799 = vrot.lane.b32.xlu0 %v529, 104
        %v1800 = vpop.permute.xlu0 %1799
        %v1801 = vsel %vm630, %v1798, 0
        %v1803 = vsel %vm630, %v1800, 0
        %1805 = vmatprep.subr.mxu0 0.0
        %1806 = vmatpush1.xpose.msra.mxu0 0.0
        %1807 = vmatprep.subr.mxu0 0.0
        %1808 = vmatpush1.xpose.msra.mxu0 0.0
        %1809 = vmatprep.subr.mxu0 0.0
        %1810 = vmatpush1.xpose.msra.mxu0 0.0
        %1811 = vmatprep.subr.mxu0 0.0
        %1812 = vmatpush1.xpose.msra.mxu0 0.0
        %1813 = vmatprep.subr.mxu0 0.0
        %1814 = vmatpush1.xpose.msra.mxu0 0.0
        %1815 = vmatprep.subr.mxu0 0.0
        %1816 = vmatpush1.xpose.msra.mxu0 0.0
        %1817 = vmatprep.subr.mxu0 0.0
        %1818 = vmatpush1.xpose.msra.mxu0 0.0
        %1819 = vmatprep.subr.mxu0 0.0
        %1820 = vmatpush1.xpose.msra.mxu0 0.0
        %1821 = vmatprep.subr.mxu0 0.0
        %1822 = vmatpush1.xpose.msra.mxu0 0.0
        %1823 = vmatprep.subr.mxu0 0.0
        %1824 = vmatpush1.xpose.msra.mxu0 0.0
        %1825 = vmatprep.subr.mxu0 0.0
        %1826 = vmatpush1.xpose.msra.mxu0 0.0
        %1827 = vmatprep.subr.mxu0 0.0
        %1828 = vmatpush1.xpose.msra.mxu0 0.0
        %1829 = vmatprep.subr.mxu0 0.0
        %1830 = vmatpush1.xpose.msra.mxu0 0.0
        %1831 = vmatprep.subr.mxu0 0.0
        %1832 = vmatpush1.xpose.msra.mxu0 0.0
        %1833 = vmatprep.subr.mxu0 0.0
        %1834 = vmatpush1.xpose.msra.mxu0 %v1803
        %1835 = vmatprep.subr.mxu0 0.0
        %1836 = vmatpush1.xpose.msra.mxu0 %v1801
        %1837 = vmatprep.subr.mxu0 0.0
        %1838 = vmatpush2.xpose.msra.mxu0 0.0
        %1839 = vmatprep.subr.mxu0 0.0
        %1840 = vmatpush2.xpose.msra.mxu0 0.0
        %1841 = vmatprep.subr.mxu0 0.0
        %1842 = vmatpush2.xpose.msra.mxu0 0.0
        %1843 = vmatprep.subr.mxu0 0.0
        %1844 = vmatpush2.xpose.msra.mxu0 0.0
        %1845 = vmatprep.subr.mxu0 0.0
        %1846 = vmatpush2.xpose.msra.mxu0 0.0
        %1847 = vmatprep.subr.mxu0 0.0
        %1848 = vmatpush2.xpose.msra.mxu0 0.0
        %1849 = vmatprep.subr.mxu0 0.0
        %1850 = vmatpush2.xpose.msra.mxu0 0.0
        %1851 = vmatprep.subr.mxu0 0.0
        %1852 = vmatpush2.xpose.msra.mxu0 0.0
        %1853 = vmatprep.subr.mxu0 0.0
        %1854 = vmatpush2.xpose.msra.mxu0 0.0
        %1855 = vmatprep.subr.mxu0 0.0
        %1856 = vmatpush2.xpose.msra.mxu0 0.0
        %1857 = vmatprep.subr.mxu0 0.0
        %1858 = vmatpush2.xpose.msra.mxu0 0.0
        %1859 = vmatprep.subr.mxu0 0.0
        %1860 = vmatpush2.xpose.msra.mxu0 0.0
        %1861 = vmatprep.subr.mxu0 0.0
        %1862 = vmatpush2.xpose.msra.mxu0 0.0
        %1863 = vmatprep.subr.mxu0 0.0
        %1864 = vmatpush2.xpose.msra.mxu0 0.0
        %1865 = vmatprep.subr.mxu0 0.0
        %1866 = vmatpush2.xpose.msra.mxu0 0.0
        %1867 = vmatprep.subr.mxu0 0.0
        %1868 = vmatpush2.xpose.msra.mxu0 0.0
        %1869 = vmatprep.mubr.f32.mxu0 0.0
        %1870 = vmatmul.mubr.f32.gmra.mxu0 %v1721
        %v1871 = vpop.f32.mrf.mxu0
        %v1872 = vadd.f32 0.0, %v1871
        %v1873 = vpop.f32.mrf.mxu0
        %1874 = vdwg.mxu0
        %v1875 = vsel %vm786, %v1794, -inf
        %1876 = vmax.xlane.f32.xlu0 %v1875
        %v1877 = vpop.xlane.xlu0 %1876
        %v1878 = vsel %vm786, %v1872, -inf
        %1879 = vmax.xlane.f32.xlu0 %v1878
        %v1880 = vpop.xlane.xlu0 %1879
        %v1881 = vsub.f32 %v1794, %v1877
        %v1882 = vsub.f32 %v1872, %v1880
        %v1883 = vmul.f32 %v1881, 1.442695
        %v1884 = vpow.pop %v1883
        %v1885 = vmul.f32 %v1882, 1.442695
        %v1886 = vpow.pop %v1885
        %v1887 = vsel %vm786, %v1884, 0.0
        %1888 = vadd.xlane.f32.xlu0 %v1887
        %v1889 = vpop.xlane.xlu0 %1888
        %v1890 = vsel %vm786, %v1886, 0.0
        %1891 = vadd.xlane.f32.xlu0 %v1890
        %v1892 = vpop.xlane.xlu0 %1891
        %v1893 = vrcp.pop %v1889
        %v1894 = vrcp.pop %v1892
        %v1895 = vmul.f32 %v1889, %v1893
        %v1896 = vmul.f32 %v1892, %v1894
        %v1897 = vsub.f32 2.0, %v1895
        %v1898 = vsub.f32 2.0, %v1896
        %v1899 = vmul.f32 %v1893, %v1897
        %v1900 = vmul.f32 %v1894, %v1898
        %v1901 = vmul.f32 %v1889, %v1899
        %v1902 = vmul.f32 %v1892, %v1900
        %v1903 = vsub.f32 2.0, %v1901
        %v1904 = vsub.f32 2.0, %v1902
        %v1905 = vmul.f32 %v1899, %v1903
        %v1906 = vmul.f32 %v1900, %v1904
        %v1907 = vmul.f32 %v1884, %v1905
        %v1908 = vmul.f32 %v1886, %v1906
        %1909 = vrot.lane.b32.xlu0 %v610, 104
        %v1910 = vpop.permute.xlu0 %1909
        %1911 = vrot.lane.b32.xlu0 %v615, 104
        %v1912 = vpop.permute.xlu0 %1911
        %v1916 = vsel %vm821, %v1907, 0
        %1918 = vmatprep.subr.mxu0 0.0
        %1919 = vmatpush1.msra.mxu0 0.0
        %1920 = vmatprep.subr.mxu0 0.0
        %1921 = vmatpush1.msra.mxu0 0.0
        %1922 = vmatprep.subr.mxu0 0.0
        %1923 = vmatpush1.msra.mxu0 0.0
        %1924 = vmatprep.subr.mxu0 0.0
        %1925 = vmatpush1.msra.mxu0 0.0
        %1926 = vmatprep.subr.mxu0 0.0
        %1927 = vmatpush1.msra.mxu0 0.0
        %1928 = vmatprep.subr.mxu0 0.0
        %1929 = vmatpush1.msra.mxu0 0.0
        %1930 = vmatprep.subr.mxu0 0.0
        %1931 = vmatpush1.msra.mxu0 0.0
        %1932 = vmatprep.subr.mxu0 0.0
        %1933 = vmatpush1.msra.mxu0 0.0
        %1934 = vmatprep.subr.mxu0 0.0
        %1935 = vmatpush1.msra.mxu0 0.0
        %1936 = vmatprep.subr.mxu0 0.0
        %1937 = vmatpush1.msra.mxu0 0.0
        %1938 = vmatprep.subr.mxu0 0.0
        %1939 = vmatpush1.msra.mxu0 0.0
        %1940 = vmatprep.subr.mxu0 0.0
        %1941 = vmatpush1.msra.mxu0 0.0
        %1942 = vmatprep.subr.mxu0 0.0
        %1943 = vmatpush1.msra.mxu0 0.0
        %1944 = vmatprep.subr.mxu0 0.0
        %1945 = vmatpush1.msra.mxu0 0.0
        %1946 = vmatprep.subr.mxu0 0.0
        %1947 = vmatpush1.msra.mxu0 %v1912
        %1948 = vmatprep.subr.mxu0 0.0
        %1949 = vmatpush1.msra.mxu0 %v1910
        %1950 = vmatprep.subr.mxu0 0.0
        %1951 = vmatpush2.msra.mxu0 0.0
        %1952 = vmatprep.subr.mxu0 0.0
        %1953 = vmatpush2.msra.mxu0 0.0
        %1954 = vmatprep.subr.mxu0 0.0
        %1955 = vmatpush2.msra.mxu0 0.0
        %1956 = vmatprep.subr.mxu0 0.0
        %1957 = vmatpush2.msra.mxu0 0.0
        %1958 = vmatprep.subr.mxu0 0.0
        %1959 = vmatpush2.msra.mxu0 0.0
        %1960 = vmatprep.subr.mxu0 0.0
        %1961 = vmatpush2.msra.mxu0 0.0
        %1962 = vmatprep.subr.mxu0 0.0
        %1963 = vmatpush2.msra.mxu0 0.0
        %1964 = vmatprep.subr.mxu0 0.0
        %1965 = vmatpush2.msra.mxu0 0.0
        %1966 = vmatprep.subr.mxu0 0.0
        %1967 = vmatpush2.msra.mxu0 0.0
        %1968 = vmatprep.subr.mxu0 0.0
        %1969 = vmatpush2.msra.mxu0 0.0
        %1970 = vmatprep.subr.mxu0 0.0
        %1971 = vmatpush2.msra.mxu0 0.0
        %1972 = vmatprep.subr.mxu0 0.0
        %1973 = vmatpush2.msra.mxu0 0.0
        %1974 = vmatprep.subr.mxu0 0.0
        %1975 = vmatpush2.msra.mxu0 0.0
        %1976 = vmatprep.subr.mxu0 0.0
        %1977 = vmatpush2.msra.mxu0 0.0
        %1978 = vmatprep.subr.mxu0 0.0
        %1979 = vmatpush2.msra.mxu0 0.0
        %1980 = vmatprep.subr.mxu0 0.0
        %1981 = vmatpush2.msra.mxu0 0.0
        %1982 = vmatprep.mubr.f32.mxu0 0.0
        %1983 = vmatmul.mubr.f32.gmra.mxu0 %v1916
        %v1984 = vpop.f32.mrf.mxu0
        %v1985 = vadd.f32 0.0, %v1984
        %v1986 = vpop.f32.mrf.mxu0
        %1987 = vdwg.mxu0
        %1988 = vrot.lane.b32.xlu0 %v620, 104
        %v1989 = vpop.permute.xlu0 %1988
        %1990 = vrot.lane.b32.xlu0 %v625, 104
        %v1991 = vpop.permute.xlu0 %1990
        %v1995 = vsel %vm821, %v1908, 0
        %1997 = vmatprep.subr.mxu0 0.0
        %1998 = vmatpush1.msra.mxu0 0.0
        %1999 = vmatprep.subr.mxu0 0.0
        %2000 = vmatpush1.msra.mxu0 0.0
        %2001 = vmatprep.subr.mxu0 0.0
        %2002 = vmatpush1.msra.mxu0 0.0
        %2003 = vmatprep.subr.mxu0 0.0
        %2004 = vmatpush1.msra.mxu0 0.0
        %2005 = vmatprep.subr.mxu0 0.0
        %2006 = vmatpush1.msra.mxu0 0.0
        %2007 = vmatprep.subr.mxu0 0.0
        %2008 = vmatpush1.msra.mxu0 0.0
        %2009 = vmatprep.subr.mxu0 0.0
        %2010 = vmatpush1.msra.mxu0 0.0
        %2011 = vmatprep.subr.mxu0 0.0
        %2012 = vmatpush1.msra.mxu0 0.0
        %2013 = vmatprep.subr.mxu0 0.0
        %2014 = vmatpush1.msra.mxu0 0.0
        %2015 = vmatprep.subr.mxu0 0.0
        %2016 = vmatpush1.msra.mxu0 0.0
        %2017 = vmatprep.subr.mxu0 0.0
        %2018 = vmatpush1.msra.mxu0 0.0
        %2019 = vmatprep.subr.mxu0 0.0
        %2020 = vmatpush1.msra.mxu0 0.0
        %2021 = vmatprep.subr.mxu0 0.0
        %2022 = vmatpush1.msra.mxu0 0.0
        %2023 = vmatprep.subr.mxu0 0.0
        %2024 = vmatpush1.msra.mxu0 0.0
        %2025 = vmatprep.subr.mxu0 0.0
        %2026 = vmatpush1.msra.mxu0 %v1991
        %2027 = vmatprep.subr.mxu0 0.0
        %2028 = vmatpush1.msra.mxu0 %v1989
        %2029 = vmatprep.subr.mxu0 0.0
        %2030 = vmatpush2.msra.mxu0 0.0
        %2031 = vmatprep.subr.mxu0 0.0
        %2032 = vmatpush2.msra.mxu0 0.0
        %2033 = vmatprep.subr.mxu0 0.0
        %2034 = vmatpush2.msra.mxu0 0.0
        %2035 = vmatprep.subr.mxu0 0.0
        %2036 = vmatpush2.msra.mxu0 0.0
        %2037 = vmatprep.subr.mxu0 0.0
        %2038 = vmatpush2.msra.mxu0 0.0
        %2039 = vmatprep.subr.mxu0 0.0
        %2040 = vmatpush2.msra.mxu0 0.0
        %2041 = vmatprep.subr.mxu0 0.0
        %2042 = vmatpush2.msra.mxu0 0.0
        %2043 = vmatprep.subr.mxu0 0.0
        %2044 = vmatpush2.msra.mxu0 0.0
        %2045 = vmatprep.subr.mxu0 0.0
        %2046 = vmatpush2.msra.mxu0 0.0
        %2047 = vmatprep.subr.mxu0 0.0
        %2048 = vmatpush2.msra.mxu0 0.0
        %2049 = vmatprep.subr.mxu0 0.0
        %2050 = vmatpush2.msra.mxu0 0.0
        %2051 = vmatprep.subr.mxu0 0.0
        %2052 = vmatpush2.msra.mxu0 0.0
        %2053 = vmatprep.subr.mxu0 0.0
        %2054 = vmatpush2.msra.mxu0 0.0
        %2055 = vmatprep.subr.mxu0 0.0
        %2056 = vmatpush2.msra.mxu0 0.0
        %2057 = vmatprep.subr.mxu0 0.0
        %2058 = vmatpush2.msra.mxu0 0.0
        %2059 = vmatprep.subr.mxu0 0.0
        %2060 = vmatpush2.msra.mxu0 0.0
        %2061 = vmatprep.mubr.f32.mxu0 0.0
        %2062 = vmatmul.mubr.f32.gmra.mxu0 %v1995
        %v2063 = vpop.f32.mrf.mxu0
        %v2064 = vadd.f32 0.0, %v2063
        %v2065 = vpop.f32.mrf.mxu0
        %2066 = vdwg.mxu0
        %2069 = vrot.lane.b32.xlu0 %v1985, 24
        %v2070 = vpop.permute.xlu0 %2069
        %2071 = vrot.lane.b32.xlu0 %v2064, 24
        %v2072 = vpop.permute.xlu0 %2071
        %v2075 = vadd.f32 %v628, %v2070
        %v2076 = vadd.f32 %v628, %v2072
        %v2079 = vcombine.low %v2075, %v2076
        %vm2081 = vcmask 261312
        %2082 = vst.msk [vmem:[#allocation2] sm:$0xff] %vm2081, %v2079
        %v2083 = vld [vmem:[#allocation2] sm:$0xff]
        %v2084 = vld [vmem:[#allocation12] sm:$0xff]
        %v2085 = vld [vmem:[#allocation12 + $0x8] sm:$0xff]
        %v2086 = vld [vmem:[#allocation12 + $0x10] sm:$0xff]
        %v2087 = vld [vmem:[#allocation12 + $0x18] sm:$0xff]
        %v2088 = vld [vmem:[%s8] sm:$0x1]
        %v2090 = vlaneseq
        %v2091 = vshrl.u32 %v2090, 7
        %v2092 = vsub.s32 0, %v2091
        %v2093 = vrot.slane %v2088, %v2092
        %v2096 = vsel %vm434, %v2083, 0
        %2098 = vmatprep.subr.mxu0 0.0
        %2099 = vmatpush1.msra.mxu0 0.0
        %2100 = vmatprep.subr.mxu0 0.0
        %2101 = vmatpush1.msra.mxu0 0.0
        %2102 = vmatprep.subr.mxu0 0.0
        %2103 = vmatpush1.msra.mxu0 0.0
        %2104 = vmatprep.subr.mxu0 0.0
        %2105 = vmatpush1.msra.mxu0 0.0
        %2106 = vmatprep.subr.mxu0 0.0
        %2107 = vmatpush1.msra.mxu0 0.0
        %2108 = vmatprep.subr.mxu0 0.0
        %2109 = vmatpush1.msra.mxu0 0.0
        %2110 = vmatprep.subr.mxu0 0.0
        %2111 = vmatpush1.msra.mxu0 0.0
        %2112 = vmatprep.subr.mxu0 0.0
        %2113 = vmatpush1.msra.mxu0 0.0
        %2114 = vmatprep.subr.mxu0 0.0
        %2115 = vmatpush1.msra.mxu0 0.0
        %2116 = vmatprep.subr.mxu0 0.0
        %2117 = vmatpush1.msra.mxu0 0.0
        %2118 = vmatprep.subr.mxu0 0.0
        %2119 = vmatpush1.msra.mxu0 0.0
        %2120 = vmatprep.subr.mxu0 0.0
        %2121 = vmatpush1.msra.mxu0 0.0
        %2122 = vmatprep.subr.mxu0 0.0
        %2123 = vmatpush1.msra.mxu0 %v2087
        %2124 = vmatprep.subr.mxu0 0.0
        %2125 = vmatpush1.msra.mxu0 %v2086
        %2126 = vmatprep.subr.mxu0 0.0
        %2127 = vmatpush1.msra.mxu0 %v2085
        %2128 = vmatprep.subr.mxu0 0.0
        %2129 = vmatpush1.msra.mxu0 %v2084
        %2130 = vmatprep.subr.mxu0 0.0
        %2131 = vmatpush2.msra.mxu0 0.0
        %2132 = vmatprep.subr.mxu0 0.0
        %2133 = vmatpush2.msra.mxu0 0.0
        %2134 = vmatprep.subr.mxu0 0.0
        %2135 = vmatpush2.msra.mxu0 0.0
        %2136 = vmatprep.subr.mxu0 0.0
        %2137 = vmatpush2.msra.mxu0 0.0
        %2138 = vmatprep.subr.mxu0 0.0
        %2139 = vmatpush2.msra.mxu0 0.0
        %2140 = vmatprep.subr.mxu0 0.0
        %2141 = vmatpush2.msra.mxu0 0.0
        %2142 = vmatprep.subr.mxu0 0.0
        %2143 = vmatpush2.msra.mxu0 0.0
        %2144 = vmatprep.subr.mxu0 0.0
        %2145 = vmatpush2.msra.mxu0 0.0
        %2146 = vmatprep.subr.mxu0 0.0
        %2147 = vmatpush2.msra.mxu0 0.0
        %2148 = vmatprep.subr.mxu0 0.0
        %2149 = vmatpush2.msra.mxu0 0.0
        %2150 = vmatprep.subr.mxu0 0.0
        %2151 = vmatpush2.msra.mxu0 0.0
        %2152 = vmatprep.subr.mxu0 0.0
        %2153 = vmatpush2.msra.mxu0 0.0
        %2154 = vmatprep.subr.mxu0 0.0
        %2155 = vmatpush2.msra.mxu0 0.0
        %2156 = vmatprep.subr.mxu0 0.0
        %2157 = vmatpush2.msra.mxu0 0.0
        %2158 = vmatprep.subr.mxu0 0.0
        %2159 = vmatpush2.msra.mxu0 0.0
        %2160 = vmatprep.subr.mxu0 0.0
        %2161 = vmatpush2.msra.mxu0 0.0
        %2162 = vmatprep.mubr.f32.mxu0 0.0
        %2163 = vmatmul.mubr.f32.gmra.mxu0 %v2096
        %v2164 = vpop.f32.mrf.mxu0
        %v2165 = vadd.f32 %v2093, %v2164
        %v2166 = vpop.f32.mrf.mxu0
        %2167 = vdwg.mxu0
        %v2168 = vmax.f32 %v2165, 0.0
        %v2169 = vadd.f32 %v2083, %v2168
        %2170 = vst.msk [vmem:[%s417] sm:$0xff] %vm434, %v2169
        %s2171 = sand.u32 %s228, 1
        %s2172 = scalar_lea.sflag [#allocation5], %s2171
        %s2173 = sand.u32 %s228, 1
        %s2174 = smul.addr %s2173, 8
        %s2175 = scalar_lea.vmem [#allocation13], %s2174
        // Predicated region
        $region81: #{tpu_custom_call.1} parent=55 // pred_check
          %p2176 = pneg %p238
        $region82: #{tpu_custom_call.1} parent=55 // pred_check_branch
          %2178 = sbr.rel (%p2176) target = $region84
        $region83: #{tpu_custom_call.1} parent=55 // pred_region
          %s2180 = ssub.s32 128, 128
          %2181 = vsyncadd %s2172, %s2180
          %s2182 = smul.addr %s26, 128
          %s2183 = scalar_lea.hbm %s9, %s2182
          %s2185 = sshll.u32 %s2175, 4
          %s2186 = int_to_ptr.vmem [resolvable:$true] %s2185
          %2188 = dma.vmem_to_hbm [thread:$0]  %s2186, 128, %s2183, %s2172
        $region84: #{tpu_custom_call.1} parent=55 // pred_fallthru
          _
      $region56: #{tpu_custom_call.1} parent=5 // pred_fallthru
        _
      %p2189 = scmp.le.s32.totalorder 2, %s21
      // Predicated region
      $region85: #{tpu_custom_call.1} parent=5 // pred_check
        %p2190 = pneg %p2189
      $region86: #{tpu_custom_call.1} parent=5 // pred_check_branch
        %2192 = sbr.rel (%p2190) target = $region88
      $region87: #{tpu_custom_call.1} parent=5 // pred_region
        %s2193 = ssub.s32 %s21, 2
        // Predicated region
        $region89: #{tpu_custom_call.1} parent=87 // pred_check
          %p2194 = pneg %p244
        $region90: #{tpu_custom_call.1} parent=87 // pred_check_branch
          %2196 = sbr.rel (%p2194) target = $region92
        $region91: #{tpu_custom_call.1} parent=87 // pred_region
          %s2197 = sand.u32 %s229, 1
          %s2198 = scalar_lea.sflag [#allocation5], %s2197
          %s2199 = sand.u32 %s229, 1
          %s2200 = smul.addr %s2199, 8
          %s2201 = scalar_lea.vmem [#allocation13], %s2200
          %2202 = dma.done %s2198, 128
        $region92: #{tpu_custom_call.1} parent=87 // pred_fallthru
          _
      $region88: #{tpu_custom_call.1} parent=5 // pred_fallthru
        _
    $region6: #{tpu_custom_call.1} parent=1 // loop_footer
      %s25 = sadd.s32 1, %s21
    $region7: #{tpu_custom_call.1} parent=1 // loop_footer_branch
      %20 = sbr.rel target = $region3
    $region8: #{tpu_custom_call.1} parent=1 // loop_exit
      _
    %2203 = vsyncpa [#allocation4], 1
    %s2204 = scalar_lea.sflag [#allocation4], 1
    %2205 = vsyncpa %s2204, 1
    %2206 = vsyncpa [#allocation7], 1
    %2207 = vsyncpa [#allocation11], 1
    %2208 = vsyncpa [#allocation5], 1
    %s2209 = scalar_lea.sflag [#allocation5], 1
    %2210 = vsyncpa %s2209, 1

</llo_original>
